<compile_context>
chip_gen: v5e
topology: v5e:2x2
jax: 0.10.0
libtpu: 0.0.40
codegen_flags: <defaults>
</compile_context>

<pallas_src>
import functools

import jax
import jax.numpy as jnp
import numpy as np
from jax.experimental import pallas as pl
from jax.experimental.pallas import tpu as pltpu


# ------------------------------ fused kernel -------------------------------
def fused_kernel(cfg, ids_ref, ibat_ref, embed_ref, wih_ref, ws_ref, bias_ref,
                 out_ref):
    T, B, BP = cfg["T"], cfg["B"], cfg["BP"]
    H, Fd, D, o_dim = cfg["H"], cfg["F"], cfg["D"], cfg["o_dim"]
    off = cfg["w_off"]
    V = embed_ref.shape[0]
    K = ibat_ref.shape[1]
    TB = T * BP

    # ---- packed biases (static slices of one small slab) -------------------
    b_gi = bias_ref[0:1, :3 * H]           # GRU input-proj bias (b_ih + b_hh[r,z])
    b_hn = bias_ref[1:2, :H]               # b_hh of the n gate
    b_td = bias_ref[2:3, :2 * H]           # [td_b | td_b2]
    att_w = bias_ref[3:4, :H]              # attention weight row
    att_b = bias_ref[3:4, H:H + 1]         # attention bias (scalar)
    b_qi = bias_ref[4:5, :4 * H]           # [q_b | q_b2 | i_b | i_b2]
    b_c = bias_ref[5:6, :2 * H]            # [c_b | c_b2]
    b_o = bias_ref[6:7, :o_dim]            # output bias

    # ---- embedding lookup as one-hot matmul (exact; V is tiny here) --------
    # TODO(synk): switch to an HBM row-gather for realistic vocab (v7x VMEM).
    ids = ids_ref[...]                                          # (T*BP, 1) int32
    iota = jax.lax.broadcasted_iota(jnp.int32, (TB, V), 1)
    onehot = (iota == ids).astype(jnp.float32)                  # (T*BP, V)
    emb_all = jnp.dot(onehot, embed_ref[...],
                      preferred_element_type=jnp.float32)       # (T*BP, 300)

    # ---- hoisted GRU input projection for ALL timesteps --------------------
    gi_all = jnp.dot(emb_all, wih_ref[...],
                     preferred_element_type=jnp.float32) + b_gi  # (T*BP, 3H)

    # ---- sequential recurrence; BP=8-row slices are sublane-tile aligned ---
    whh = ws_ref[off["whh"]:off["whh"] + H, :3 * H]             # (H, 3H)
    h = jnp.zeros((BP, H), jnp.float32)
    for t in range(T):                                          # statically unrolled
        gi = gi_all[t * BP:(t + 1) * BP, :]                     # aligned (8, 3H)
        gh = jnp.dot(h, whh, preferred_element_type=jnp.float32)
        r = jax.nn.sigmoid(gi[:, :H] + gh[:, :H])
        z = jax.nn.sigmoid(gi[:, H:2 * H] + gh[:, H:2 * H])
        n = jnp.tanh(gi[:, 2 * H:] + r * (gh[:, 2 * H:] + b_hn))
        h = (1.0 - z) * n + z * h
    q_enc = h                                                   # (BP, H)

    # ---- head: F.normalize(i_batch, p=2) over dim=1 (the K axis) via rsqrt -
    i_b = ibat_ref[...]                                         # (BP, K, F)
    ssq = jnp.sum(i_b * i_b, axis=1, keepdims=True)
    i_enc = i_b * jax.lax.rsqrt(jnp.maximum(ssq, 1e-24))        # == x / max(|x|,1e-12)
    i_enc2d = i_enc.reshape(BP * K, Fd)

    # top-down gated MLP: fused [tanh|sigmoid] weights, split image/question
    wf_td = ws_ref[off["wf_td"]:off["wf_td"] + Fd, :2 * H]
    wh_td = ws_ref[off["wh_td"]:off["wh_td"] + H, :2 * H]
    ts_i = jnp.dot(i_enc2d, wf_td, preferred_element_type=jnp.float32)  # (BP*K, 2H)
    ts_q = jnp.dot(q_enc, wh_td, preferred_element_type=jnp.float32) + b_td
    ts = ts_i.reshape(BP, K, 2 * H) + ts_q[:, None, :]
    y = jnp.tanh(ts[:, :, :H]) * jax.nn.sigmoid(ts[:, :, H:])   # (BP, K, H)

    # attention logits + softmax over K (approx reciprocal -> idle EUP slot)
    att = jnp.sum(y * att_w, axis=-1, keepdims=True) + att_b    # (BP, K, 1)
    att = jnp.exp(att - jnp.max(att, axis=1, keepdims=True))
    att = att * pl.reciprocal(jnp.sum(att, axis=1, keepdims=True), approx=True)
    i_att = jnp.sum(att * i_enc, axis=1)                        # (BP, F)

    # q- and i-branch gated projections fused into ONE stacked matmul
    q_in = (q_enc if H == D else
            jnp.concatenate([q_enc, jnp.zeros((BP, D - H), jnp.float32)], axis=1))
    i_in = (i_att if Fd == D else
            jnp.concatenate([i_att, jnp.zeros((BP, D - Fd), jnp.float32)], axis=1))
    qi_in = jnp.concatenate([q_in, i_in], axis=0)               # (2*BP, D)
    wqi = ws_ref[off["wqi"]:off["wqi"] + D, :4 * H]
    g = jnp.dot(qi_in, wqi, preferred_element_type=jnp.float32) + b_qi  # (2BP, 4H)
    q = jnp.tanh(g[:BP, :H]) * jax.nn.sigmoid(g[:BP, H:2 * H])
    i = jnp.tanh(g[BP:, 2 * H:3 * H]) * jax.nn.sigmoid(g[BP:, 3 * H:])

    # scoring head
    wc = ws_ref[off["wc"]:off["wc"] + H, :2 * H]
    cg = jnp.dot(q * i, wc, preferred_element_type=jnp.float32) + b_c
    c = jnp.tanh(cg[:, :H]) * jax.nn.sigmoid(cg[:, H:])
    c_wo = ws_ref[off["c_wo"]:off["c_wo"] + H, :o_dim]
    score = jnp.dot(c, c_wo, preferred_element_type=jnp.float32) + b_o  # (BP, o)
    out_ref[...] = score[:B, :]


# ------------------------------ wrapper -------------------------------------
def model_forward(q_batch, i_batch, p):
    B, T = q_batch.shape
    H = p["whh"].shape[0]
    Fd = p["i_w"].shape[0]
    o_dim = p["c_bo"].shape[1]
    BP = ((B + 7) // 8) * 8          # pad batch to a full sublane tile
    D = max(H, Fd)

    # time-major flat token ids (row t*BP + b holds q_batch[b, t]); pad slots -> 0
    ids = jnp.pad(q_batch.T.astype(jnp.int32), ((0, 0), (0, BP - B)))
    ids = ids.reshape(T * BP, 1)
    i_pad = jnp.pad(i_batch, ((0, BP - B), (0, 0), (0, 0)))

    # GRU bias folding: r/z parts of b_hh join the hoisted input-proj bias
    bih_comb = jnp.concatenate(
        [p["bih"][:, :2 * H] + p["bhh"][:, :2 * H], p["bih"][:, 2 * H:]], axis=1)
    bhh_n = p["bhh"][:, 2 * H:]

    # lane-fused [tanh | sigmoid] gate weights
    td_wi, td_wq = p["td_w"][:Fd], p["td_w"][Fd:]
    td_w2i, td_w2q = p["td_w2"][:Fd], p["td_w2"][Fd:]
    wf_td = jnp.concatenate([td_wi, td_w2i], axis=1)            # (F, 2H)
    wh_td = jnp.concatenate([td_wq, td_w2q], axis=1)            # (H, 2H)
    wc = jnp.concatenate([p["c_w"], p["c_w2"]], axis=1)         # (H, 2H)
    wq_cat = jnp.concatenate([p["q_w"], p["q_w2"]], axis=1)     # (H, 2H)
    wi_cat = jnp.concatenate([p["i_w"], p["i_w2"]], axis=1)     # (F, 2H)
    wqi = jnp.zeros((D, 4 * H), jnp.float32)
    wqi = wqi.at[:H, :2 * H].set(wq_cat).at[:Fd, 2 * H:].set(wi_cat)

    # pack all small weights into ONE slab (8-row-aligned blocks, static offsets)
    lane_w = ((max(4 * H, 3 * H, o_dim) + 127) // 128) * 128

    def rup8(n):
        return ((n + 7) // 8) * 8

    blocks = [("whh", p["whh"]), ("wh_td", wh_td), ("wf_td", wf_td),
              ("wqi", wqi), ("wc", wc), ("c_wo", p["c_wo"])]
    w_off, parts, row = {}, [], 0
    for name, a in blocks:
        nr = rup8(a.shape[0])
        w_off[name] = row
        parts.append(jnp.pad(a, ((0, nr - a.shape[0]), (0, lane_w - a.shape[1]))))
        row += nr
    w_slab = jnp.concatenate(parts, axis=0)                     # (rows, lane_w)

    # pack all biases into ONE slab, one row per logical bias
    b_rows = [bih_comb, bhh_n,
              jnp.concatenate([p["td_b"], p["td_b2"]], axis=1),
              jnp.concatenate([p["att_w"], p["att_b"]], axis=1),
              jnp.concatenate([p["q_b"], p["q_b2"], p["i_b"], p["i_b2"]], axis=1),
              jnp.concatenate([p["c_b"], p["c_b2"]], axis=1),
              p["c_bo"]]
    bias_slab = jnp.concatenate(
        [jnp.pad(r, ((0, 0), (0, lane_w - r.shape[1]))) for r in b_rows], axis=0)

    cfg = dict(T=T, B=B, BP=BP, H=H, F=Fd, D=D, o_dim=o_dim, w_off=w_off)
    args = (ids, i_pad, p["embed"], p["wih"], w_slab, bias_slab)

    return pl.pallas_call(
        functools.partial(fused_kernel, cfg),
        out_shape=jax.ShapeDtypeStruct((B, o_dim), jnp.float32),
        in_specs=[pl.BlockSpec(memory_space=pltpu.MemorySpace.VMEM)] * len(args),
        out_specs=pl.BlockSpec(memory_space=pltpu.MemorySpace.VMEM),
        compiler_params=pltpu.CompilerParams(vmem_limit_bytes=32 * 1024 * 1024),
    )(*args)


# ----------------------------- pure-JAX reference ---------------------------
def reference_forward(q_batch, i_batch, p):
    emb = jnp.take(p["embed"], q_batch, axis=0)
    x = jnp.transpose(emb, (1, 0, 2))
    H = p["whh"].shape[0]
    B = q_batch.shape[0]
    h = jnp.zeros((B, H), jnp.float32)
    for t in range(x.shape[0]):
        gi = x[t] @ p["wih"] + p["bih"]
        gh = h @ p["whh"] + p["bhh"]
        r = jax.nn.sigmoid(gi[:, :H] + gh[:, :H])
        z = jax.nn.sigmoid(gi[:, H:2 * H] + gh[:, H:2 * H])
        n = jnp.tanh(gi[:, 2 * H:] + r * gh[:, 2 * H:])
        h = (1.0 - z) * n + z * h
    q_enc = h

    Bk, K, Fd = i_batch.shape
    norm = jnp.sqrt(jnp.sum(i_batch * i_batch, axis=1, keepdims=True))
    i_enc = i_batch / jnp.maximum(norm, 1e-12)
    q_copy = jnp.broadcast_to(q_enc[:, None, :], (Bk, K, H))
    xcat = jnp.concatenate([i_enc, q_copy], axis=-1).reshape(Bk * K, Fd + H)

    def nl(v, w, b, w2, b2):
        return jnp.tanh(v @ w + b) * jax.nn.sigmoid(v @ w2 + b2)

    y2d = nl(xcat, p["td_w"], p["td_b"], p["td_w2"], p["td_b2"])
    att = (jnp.sum(y2d * p["att_w"], axis=1, keepdims=True) + p["att_b"]).reshape(Bk, K)
    att = jax.nn.softmax(att, axis=1)[:, :, None]
    i_att = jnp.sum(att * i_enc, axis=1)
    q = nl(q_enc, p["q_w"], p["q_b"], p["q_w2"], p["q_b2"])
    i = nl(i_att, p["i_w"], p["i_b"], p["i_w2"], p["i_b2"])
    c = nl(q * i, p["c_w"], p["c_b"], p["c_w2"], p["c_b2"])
    return c @ p["c_wo"] + p["c_bo"]


# --------------------------------- main --------------------------------------
if __name__ == "__main__":
    v_size, K, f_dim, h_dim, o_dim = 50, 8, 32, 32, 16
    B, T, E = 2, 8, 300

    keys = jax.random.split(jax.random.PRNGKey(0), 32)
    ki = iter(keys)

    def w(shape, scale=0.1):
        return (scale * jax.random.normal(next(ki), shape)).astype(jnp.float32)

    params = dict(
        embed=w((v_size, E)),                      # pretrained_we (synthetic)
        wih=w((E, 3 * h_dim)), whh=w((h_dim, 3 * h_dim)),
        bih=w((1, 3 * h_dim)), bhh=w((1, 3 * h_dim)),
        td_w=w((f_dim + h_dim, h_dim)), td_b=w((1, h_dim)),
        td_w2=w((f_dim + h_dim, h_dim)), td_b2=w((1, h_dim)),
        att_w=w((1, h_dim)), att_b=w((1, 1)),      # att_w stored as (1, H) row
        q_w=w((h_dim, h_dim)), q_b=w((1, h_dim)),
        q_w2=w((h_dim, h_dim)), q_b2=w((1, h_dim)),
        i_w=w((f_dim, h_dim)), i_b=w((1, h_dim)),
        i_w2=w((f_dim, h_dim)), i_b2=w((1, h_dim)),
        c_w=w((h_dim, h_dim)), c_b=w((1, h_dim)),
        c_w2=w((h_dim, h_dim)), c_b2=w((1, h_dim)),
        c_wo=w((h_dim, o_dim)), c_bo=w((1, o_dim)),
    )

    q_batch = jax.random.randint(next(ki), (B, T), 0, v_size, dtype=jnp.int32)
    i_batch = jax.random.normal(next(ki), (B, K, f_dim), dtype=jnp.float32)

    fwd = jax.jit(model_forward)
    score = fwd(q_batch, i_batch, params)
    score = jax.block_until_ready(score)

    ref = reference_forward(q_batch, i_batch, params)
    np.testing.assert_allclose(np.asarray(score), np.asarray(ref),
                               rtol=1e-4, atol=1e-4)

    assert score.shape == (B, o_dim)
    print("KERNEL_OK")
</pallas_src>

<mosaic_0001>
module attributes {stable_mosaic.version = 11 : i64} {
  func.func @fused_kernel(%arg0: memref<64x1xi32, #tpu.memory_space<vmem>>, %arg1: memref<8x8x32xf32, #tpu.memory_space<vmem>>, %arg2: memref<50x300xf32, #tpu.memory_space<vmem>>, %arg3: memref<300x96xf32, #tpu.memory_space<vmem>>, %arg4: memref<192x128xf32, #tpu.memory_space<vmem>>, %arg5: memref<7x128xf32, #tpu.memory_space<vmem>>, %arg6: memref<2x16xf32, #tpu.memory_space<vmem>>) attributes {dimension_semantics = [], scalar_prefetch = 0 : i64, scratch_operands = 0 : i64, tpu.core_type = #tpu.core_type<tc>} {
    %c0 = arith.constant 0 : index
    %c0_0 = arith.constant 0 : index
    %0 = vector.load %arg5[%c0, %c0_0] : memref<7x128xf32, #tpu.memory_space<vmem>>, vector<1x96xf32>
    %c1 = arith.constant 1 : index
    %c0_1 = arith.constant 0 : index
    %1 = vector.load %arg5[%c1, %c0_1] : memref<7x128xf32, #tpu.memory_space<vmem>>, vector<1x32xf32>
    %c2 = arith.constant 2 : index
    %c0_2 = arith.constant 0 : index
    %2 = vector.load %arg5[%c2, %c0_2] : memref<7x128xf32, #tpu.memory_space<vmem>>, vector<1x64xf32>
    %c3 = arith.constant 3 : index
    %c0_3 = arith.constant 0 : index
    %3 = vector.load %arg5[%c3, %c0_3] : memref<7x128xf32, #tpu.memory_space<vmem>>, vector<1x32xf32>
    %c3_4 = arith.constant 3 : index
    %c32 = arith.constant 32 : index
    %4 = vector.load %arg5[%c3_4, %c32] : memref<7x128xf32, #tpu.memory_space<vmem>>, vector<1x1xf32>
    %c4 = arith.constant 4 : index
    %c0_5 = arith.constant 0 : index
    %5 = vector.load %arg5[%c4, %c0_5] : memref<7x128xf32, #tpu.memory_space<vmem>>, vector<1x128xf32>
    %c5 = arith.constant 5 : index
    %c0_6 = arith.constant 0 : index
    %6 = vector.load %arg5[%c5, %c0_6] : memref<7x128xf32, #tpu.memory_space<vmem>>, vector<1x64xf32>
    %c6 = arith.constant 6 : index
    %c0_7 = arith.constant 0 : index
    %7 = vector.load %arg5[%c6, %c0_7] : memref<7x128xf32, #tpu.memory_space<vmem>>, vector<1x16xf32>
    %c0_8 = arith.constant 0 : index
    %c0_9 = arith.constant 0 : index
    %8 = vector.load %arg0[%c0_8, %c0_9] : memref<64x1xi32, #tpu.memory_space<vmem>>, vector<64x1xi32>
    %9 = tpu.iota {dimensions = array<i32: 1>} : vector<64x50xi32>
    %10 = vector.broadcast %8 : vector<64x1xi32> to vector<64x50xi32>
    %11 = arith.cmpi eq, %9, %10 : vector<64x50xi32>
    %12 = arith.extui %11 : vector<64x50xi1> to vector<64x50xi32>
    %13 = arith.sitofp %12 : vector<64x50xi32> to vector<64x50xf32>
    %c0_10 = arith.constant 0 : index
    %c0_11 = arith.constant 0 : index
    %14 = vector.load %arg2[%c0_10, %c0_11] : memref<50x300xf32, #tpu.memory_space<vmem>>, vector<50x300xf32>
    %cst = arith.constant dense<0.000000e+00> : vector<64x300xf32>
    %15 = tpu.matmul %13, %14, %cst {dimension_numbers = #tpu.dot_dimension_numbers<[1], [0], [0], [1], [0, 0, 1, 1], [], []>} : vector<64x50xf32>, vector<50x300xf32>, vector<64x300xf32> -> vector<64x300xf32>
    %c0_12 = arith.constant 0 : index
    %c0_13 = arith.constant 0 : index
    %16 = vector.load %arg3[%c0_12, %c0_13] : memref<300x96xf32, #tpu.memory_space<vmem>>, vector<300x96xf32>
    %cst_14 = arith.constant dense<0.000000e+00> : vector<64x96xf32>
    %17 = tpu.matmul %15, %16, %cst_14 {dimension_numbers = #tpu.dot_dimension_numbers<[1], [0], [0], [1], [0, 0, 1, 1], [], []>} : vector<64x300xf32>, vector<300x96xf32>, vector<64x96xf32> -> vector<64x96xf32>
    %18 = vector.broadcast %0 : vector<1x96xf32> to vector<64x96xf32>
    %19 = arith.addf %17, %18 : vector<64x96xf32>
    %c0_15 = arith.constant 0 : index
    %c0_16 = arith.constant 0 : index
    %20 = vector.load %arg4[%c0_15, %c0_16] : memref<192x128xf32, #tpu.memory_space<vmem>>, vector<32x96xf32>
    %cst_17 = arith.constant 0.000000e+00 : f32
    %21 = vector.broadcast %cst_17 : f32 to vector<8x32xf32>
    %22 = vector.extract_strided_slice %19 {offsets = [0, 0], sizes = [8, 96], strides = [1, 1]} : vector<64x96xf32> to vector<8x96xf32>
    %cst_18 = arith.constant dense<0.000000e+00> : vector<8x96xf32>
    %23 = tpu.matmul %21, %20, %cst_18 {dimension_numbers = #tpu.dot_dimension_numbers<[1], [0], [0], [1], [0, 0, 1, 1], [], []>} : vector<8x32xf32>, vector<32x96xf32>, vector<8x96xf32> -> vector<8x96xf32>
    %24 = vector.extract_strided_slice %22 {offsets = [0, 0], sizes = [8, 32], strides = [1, 1]} : vector<8x96xf32> to vector<8x32xf32>
    %25 = vector.extract_strided_slice %23 {offsets = [0, 0], sizes = [8, 32], strides = [1, 1]} : vector<8x96xf32> to vector<8x32xf32>
    %26 = arith.addf %24, %25 : vector<8x32xf32>
    %27 = arith.negf %26 : vector<8x32xf32>
    %28 = math.exp %27 : vector<8x32xf32>
    %cst_19 = arith.constant 1.000000e+00 : f32
    %29 = vector.broadcast %cst_19 : f32 to vector<8x32xf32>
    %30 = arith.addf %29, %28 : vector<8x32xf32>
    %31 = arith.divf %29, %30 : vector<8x32xf32>
    %32 = vector.extract_strided_slice %22 {offsets = [0, 32], sizes = [8, 32], strides = [1, 1]} : vector<8x96xf32> to vector<8x32xf32>
    %33 = vector.extract_strided_slice %23 {offsets = [0, 32], sizes = [8, 32], strides = [1, 1]} : vector<8x96xf32> to vector<8x32xf32>
    %34 = arith.addf %32, %33 : vector<8x32xf32>
    %35 = arith.negf %34 : vector<8x32xf32>
    %36 = math.exp %35 : vector<8x32xf32>
    %cst_20 = arith.constant 1.000000e+00 : f32
    %37 = vector.broadcast %cst_20 : f32 to vector<8x32xf32>
    %38 = arith.addf %37, %36 : vector<8x32xf32>
    %39 = arith.divf %37, %38 : vector<8x32xf32>
    %40 = vector.extract_strided_slice %22 {offsets = [0, 64], sizes = [8, 32], strides = [1, 1]} : vector<8x96xf32> to vector<8x32xf32>
    %41 = vector.extract_strided_slice %23 {offsets = [0, 64], sizes = [8, 32], strides = [1, 1]} : vector<8x96xf32> to vector<8x32xf32>
    %42 = vector.broadcast %1 : vector<1x32xf32> to vector<8x32xf32>
    %43 = arith.addf %41, %42 : vector<8x32xf32>
    %44 = arith.mulf %31, %43 : vector<8x32xf32>
    %45 = arith.addf %40, %44 : vector<8x32xf32>
    %46 = math.tanh %45 : vector<8x32xf32>
    %cst_21 = arith.constant 1.000000e+00 : f32
    %47 = vector.broadcast %cst_21 : f32 to vector<8x32xf32>
    %48 = arith.subf %47, %39 : vector<8x32xf32>
    %49 = arith.mulf %48, %46 : vector<8x32xf32>
    %50 = arith.mulf %39, %21 : vector<8x32xf32>
    %51 = arith.addf %49, %50 : vector<8x32xf32>
    %52 = vector.extract_strided_slice %19 {offsets = [8, 0], sizes = [8, 96], strides = [1, 1]} : vector<64x96xf32> to vector<8x96xf32>
    %cst_22 = arith.constant dense<0.000000e+00> : vector<8x96xf32>
    %53 = tpu.matmul %51, %20, %cst_22 {dimension_numbers = #tpu.dot_dimension_numbers<[1], [0], [0], [1], [0, 0, 1, 1], [], []>} : vector<8x32xf32>, vector<32x96xf32>, vector<8x96xf32> -> vector<8x96xf32>
    %54 = vector.extract_strided_slice %52 {offsets = [0, 0], sizes = [8, 32], strides = [1, 1]} : vector<8x96xf32> to vector<8x32xf32>
    %55 = vector.extract_strided_slice %53 {offsets = [0, 0], sizes = [8, 32], strides = [1, 1]} : vector<8x96xf32> to vector<8x32xf32>
    %56 = arith.addf %54, %55 : vector<8x32xf32>
    %57 = arith.negf %56 : vector<8x32xf32>
    %58 = math.exp %57 : vector<8x32xf32>
    %cst_23 = arith.constant 1.000000e+00 : f32
    %59 = vector.broadcast %cst_23 : f32 to vector<8x32xf32>
    %60 = arith.addf %59, %58 : vector<8x32xf32>
    %61 = arith.divf %59, %60 : vector<8x32xf32>
    %62 = vector.extract_strided_slice %52 {offsets = [0, 32], sizes = [8, 32], strides = [1, 1]} : vector<8x96xf32> to vector<8x32xf32>
    %63 = vector.extract_strided_slice %53 {offsets = [0, 32], sizes = [8, 32], strides = [1, 1]} : vector<8x96xf32> to vector<8x32xf32>
    %64 = arith.addf %62, %63 : vector<8x32xf32>
    %65 = arith.negf %64 : vector<8x32xf32>
    %66 = math.exp %65 : vector<8x32xf32>
    %cst_24 = arith.constant 1.000000e+00 : f32
    %67 = vector.broadcast %cst_24 : f32 to vector<8x32xf32>
    %68 = arith.addf %67, %66 : vector<8x32xf32>
    %69 = arith.divf %67, %68 : vector<8x32xf32>
    %70 = vector.extract_strided_slice %52 {offsets = [0, 64], sizes = [8, 32], strides = [1, 1]} : vector<8x96xf32> to vector<8x32xf32>
    %71 = vector.extract_strided_slice %53 {offsets = [0, 64], sizes = [8, 32], strides = [1, 1]} : vector<8x96xf32> to vector<8x32xf32>
    %72 = vector.broadcast %1 : vector<1x32xf32> to vector<8x32xf32>
    %73 = arith.addf %71, %72 : vector<8x32xf32>
    %74 = arith.mulf %61, %73 : vector<8x32xf32>
    %75 = arith.addf %70, %74 : vector<8x32xf32>
    %76 = math.tanh %75 : vector<8x32xf32>
    %cst_25 = arith.constant 1.000000e+00 : f32
    %77 = vector.broadcast %cst_25 : f32 to vector<8x32xf32>
    %78 = arith.subf %77, %69 : vector<8x32xf32>
    %79 = arith.mulf %78, %76 : vector<8x32xf32>
    %80 = arith.mulf %69, %51 : vector<8x32xf32>
    %81 = arith.addf %79, %80 : vector<8x32xf32>
    %82 = vector.extract_strided_slice %19 {offsets = [16, 0], sizes = [8, 96], strides = [1, 1]} : vector<64x96xf32> to vector<8x96xf32>
    %cst_26 = arith.constant dense<0.000000e+00> : vector<8x96xf32>
    %83 = tpu.matmul %81, %20, %cst_26 {dimension_numbers = #tpu.dot_dimension_numbers<[1], [0], [0], [1], [0, 0, 1, 1], [], []>} : vector<8x32xf32>, vector<32x96xf32>, vector<8x96xf32> -> vector<8x96xf32>
    %84 = vector.extract_strided_slice %82 {offsets = [0, 0], sizes = [8, 32], strides = [1, 1]} : vector<8x96xf32> to vector<8x32xf32>
    %85 = vector.extract_strided_slice %83 {offsets = [0, 0], sizes = [8, 32], strides = [1, 1]} : vector<8x96xf32> to vector<8x32xf32>
    %86 = arith.addf %84, %85 : vector<8x32xf32>
    %87 = arith.negf %86 : vector<8x32xf32>
    %88 = math.exp %87 : vector<8x32xf32>
    %cst_27 = arith.constant 1.000000e+00 : f32
    %89 = vector.broadcast %cst_27 : f32 to vector<8x32xf32>
    %90 = arith.addf %89, %88 : vector<8x32xf32>
    %91 = arith.divf %89, %90 : vector<8x32xf32>
    %92 = vector.extract_strided_slice %82 {offsets = [0, 32], sizes = [8, 32], strides = [1, 1]} : vector<8x96xf32> to vector<8x32xf32>
    %93 = vector.extract_strided_slice %83 {offsets = [0, 32], sizes = [8, 32], strides = [1, 1]} : vector<8x96xf32> to vector<8x32xf32>
    %94 = arith.addf %92, %93 : vector<8x32xf32>
    %95 = arith.negf %94 : vector<8x32xf32>
    %96 = math.exp %95 : vector<8x32xf32>
    %cst_28 = arith.constant 1.000000e+00 : f32
    %97 = vector.broadcast %cst_28 : f32 to vector<8x32xf32>
    %98 = arith.addf %97, %96 : vector<8x32xf32>
    %99 = arith.divf %97, %98 : vector<8x32xf32>
    %100 = vector.extract_strided_slice %82 {offsets = [0, 64], sizes = [8, 32], strides = [1, 1]} : vector<8x96xf32> to vector<8x32xf32>
    %101 = vector.extract_strided_slice %83 {offsets = [0, 64], sizes = [8, 32], strides = [1, 1]} : vector<8x96xf32> to vector<8x32xf32>
    %102 = vector.broadcast %1 : vector<1x32xf32> to vector<8x32xf32>
    %103 = arith.addf %101, %102 : vector<8x32xf32>
    %104 = arith.mulf %91, %103 : vector<8x32xf32>
    %105 = arith.addf %100, %104 : vector<8x32xf32>
    %106 = math.tanh %105 : vector<8x32xf32>
    %cst_29 = arith.constant 1.000000e+00 : f32
    %107 = vector.broadcast %cst_29 : f32 to vector<8x32xf32>
    %108 = arith.subf %107, %99 : vector<8x32xf32>
    %109 = arith.mulf %108, %106 : vector<8x32xf32>
    %110 = arith.mulf %99, %81 : vector<8x32xf32>
    %111 = arith.addf %109, %110 : vector<8x32xf32>
    %112 = vector.extract_strided_slice %19 {offsets = [24, 0], sizes = [8, 96], strides = [1, 1]} : vector<64x96xf32> to vector<8x96xf32>
    %cst_30 = arith.constant dense<0.000000e+00> : vector<8x96xf32>
    %113 = tpu.matmul %111, %20, %cst_30 {dimension_numbers = #tpu.dot_dimension_numbers<[1], [0], [0], [1], [0, 0, 1, 1], [], []>} : vector<8x32xf32>, vector<32x96xf32>, vector<8x96xf32> -> vector<8x96xf32>
    %114 = vector.extract_strided_slice %112 {offsets = [0, 0], sizes = [8, 32], strides = [1, 1]} : vector<8x96xf32> to vector<8x32xf32>
    %115 = vector.extract_strided_slice %113 {offsets = [0, 0], sizes = [8, 32], strides = [1, 1]} : vector<8x96xf32> to vector<8x32xf32>
    %116 = arith.addf %114, %115 : vector<8x32xf32>
    %117 = arith.negf %116 : vector<8x32xf32>
    %118 = math.exp %117 : vector<8x32xf32>
    %cst_31 = arith.constant 1.000000e+00 : f32
    %119 = vector.broadcast %cst_31 : f32 to vector<8x32xf32>
    %120 = arith.addf %119, %118 : vector<8x32xf32>
    %121 = arith.divf %119, %120 : vector<8x32xf32>
    %122 = vector.extract_strided_slice %112 {offsets = [0, 32], sizes = [8, 32], strides = [1, 1]} : vector<8x96xf32> to vector<8x32xf32>
    %123 = vector.extract_strided_slice %113 {offsets = [0, 32], sizes = [8, 32], strides = [1, 1]} : vector<8x96xf32> to vector<8x32xf32>
    %124 = arith.addf %122, %123 : vector<8x32xf32>
    %125 = arith.negf %124 : vector<8x32xf32>
    %126 = math.exp %125 : vector<8x32xf32>
    %cst_32 = arith.constant 1.000000e+00 : f32
    %127 = vector.broadcast %cst_32 : f32 to vector<8x32xf32>
    %128 = arith.addf %127, %126 : vector<8x32xf32>
    %129 = arith.divf %127, %128 : vector<8x32xf32>
    %130 = vector.extract_strided_slice %112 {offsets = [0, 64], sizes = [8, 32], strides = [1, 1]} : vector<8x96xf32> to vector<8x32xf32>
    %131 = vector.extract_strided_slice %113 {offsets = [0, 64], sizes = [8, 32], strides = [1, 1]} : vector<8x96xf32> to vector<8x32xf32>
    %132 = vector.broadcast %1 : vector<1x32xf32> to vector<8x32xf32>
    %133 = arith.addf %131, %132 : vector<8x32xf32>
    %134 = arith.mulf %121, %133 : vector<8x32xf32>
    %135 = arith.addf %130, %134 : vector<8x32xf32>
    %136 = math.tanh %135 : vector<8x32xf32>
    %cst_33 = arith.constant 1.000000e+00 : f32
    %137 = vector.broadcast %cst_33 : f32 to vector<8x32xf32>
    %138 = arith.subf %137, %129 : vector<8x32xf32>
    %139 = arith.mulf %138, %136 : vector<8x32xf32>
    %140 = arith.mulf %129, %111 : vector<8x32xf32>
    %141 = arith.addf %139, %140 : vector<8x32xf32>
    %142 = vector.extract_strided_slice %19 {offsets = [32, 0], sizes = [8, 96], strides = [1, 1]} : vector<64x96xf32> to vector<8x96xf32>
    %cst_34 = arith.constant dense<0.000000e+00> : vector<8x96xf32>
    %143 = tpu.matmul %141, %20, %cst_34 {dimension_numbers = #tpu.dot_dimension_numbers<[1], [0], [0], [1], [0, 0, 1, 1], [], []>} : vector<8x32xf32>, vector<32x96xf32>, vector<8x96xf32> -> vector<8x96xf32>
    %144 = vector.extract_strided_slice %142 {offsets = [0, 0], sizes = [8, 32], strides = [1, 1]} : vector<8x96xf32> to vector<8x32xf32>
    %145 = vector.extract_strided_slice %143 {offsets = [0, 0], sizes = [8, 32], strides = [1, 1]} : vector<8x96xf32> to vector<8x32xf32>
    %146 = arith.addf %144, %145 : vector<8x32xf32>
    %147 = arith.negf %146 : vector<8x32xf32>
    %148 = math.exp %147 : vector<8x32xf32>
    %cst_35 = arith.constant 1.000000e+00 : f32
    %149 = vector.broadcast %cst_35 : f32 to vector<8x32xf32>
    %150 = arith.addf %149, %148 : vector<8x32xf32>
    %151 = arith.divf %149, %150 : vector<8x32xf32>
    %152 = vector.extract_strided_slice %142 {offsets = [0, 32], sizes = [8, 32], strides = [1, 1]} : vector<8x96xf32> to vector<8x32xf32>
    %153 = vector.extract_strided_slice %143 {offsets = [0, 32], sizes = [8, 32], strides = [1, 1]} : vector<8x96xf32> to vector<8x32xf32>
    %154 = arith.addf %152, %153 : vector<8x32xf32>
    %155 = arith.negf %154 : vector<8x32xf32>
    %156 = math.exp %155 : vector<8x32xf32>
    %cst_36 = arith.constant 1.000000e+00 : f32
    %157 = vector.broadcast %cst_36 : f32 to vector<8x32xf32>
    %158 = arith.addf %157, %156 : vector<8x32xf32>
    %159 = arith.divf %157, %158 : vector<8x32xf32>
    %160 = vector.extract_strided_slice %142 {offsets = [0, 64], sizes = [8, 32], strides = [1, 1]} : vector<8x96xf32> to vector<8x32xf32>
    %161 = vector.extract_strided_slice %143 {offsets = [0, 64], sizes = [8, 32], strides = [1, 1]} : vector<8x96xf32> to vector<8x32xf32>
    %162 = vector.broadcast %1 : vector<1x32xf32> to vector<8x32xf32>
    %163 = arith.addf %161, %162 : vector<8x32xf32>
    %164 = arith.mulf %151, %163 : vector<8x32xf32>
    %165 = arith.addf %160, %164 : vector<8x32xf32>
    %166 = math.tanh %165 : vector<8x32xf32>
    %cst_37 = arith.constant 1.000000e+00 : f32
    %167 = vector.broadcast %cst_37 : f32 to vector<8x32xf32>
    %168 = arith.subf %167, %159 : vector<8x32xf32>
    %169 = arith.mulf %168, %166 : vector<8x32xf32>
    %170 = arith.mulf %159, %141 : vector<8x32xf32>
    %171 = arith.addf %169, %170 : vector<8x32xf32>
    %172 = vector.extract_strided_slice %19 {offsets = [40, 0], sizes = [8, 96], strides = [1, 1]} : vector<64x96xf32> to vector<8x96xf32>
    %cst_38 = arith.constant dense<0.000000e+00> : vector<8x96xf32>
    %173 = tpu.matmul %171, %20, %cst_38 {dimension_numbers = #tpu.dot_dimension_numbers<[1], [0], [0], [1], [0, 0, 1, 1], [], []>} : vector<8x32xf32>, vector<32x96xf32>, vector<8x96xf32> -> vector<8x96xf32>
    %174 = vector.extract_strided_slice %172 {offsets = [0, 0], sizes = [8, 32], strides = [1, 1]} : vector<8x96xf32> to vector<8x32xf32>
    %175 = vector.extract_strided_slice %173 {offsets = [0, 0], sizes = [8, 32], strides = [1, 1]} : vector<8x96xf32> to vector<8x32xf32>
    %176 = arith.addf %174, %175 : vector<8x32xf32>
    %177 = arith.negf %176 : vector<8x32xf32>
    %178 = math.exp %177 : vector<8x32xf32>
    %cst_39 = arith.constant 1.000000e+00 : f32
    %179 = vector.broadcast %cst_39 : f32 to vector<8x32xf32>
    %180 = arith.addf %179, %178 : vector<8x32xf32>
    %181 = arith.divf %179, %180 : vector<8x32xf32>
    %182 = vector.extract_strided_slice %172 {offsets = [0, 32], sizes = [8, 32], strides = [1, 1]} : vector<8x96xf32> to vector<8x32xf32>
    %183 = vector.extract_strided_slice %173 {offsets = [0, 32], sizes = [8, 32], strides = [1, 1]} : vector<8x96xf32> to vector<8x32xf32>
    %184 = arith.addf %182, %183 : vector<8x32xf32>
    %185 = arith.negf %184 : vector<8x32xf32>
    %186 = math.exp %185 : vector<8x32xf32>
    %cst_40 = arith.constant 1.000000e+00 : f32
    %187 = vector.broadcast %cst_40 : f32 to vector<8x32xf32>
    %188 = arith.addf %187, %186 : vector<8x32xf32>
    %189 = arith.divf %187, %188 : vector<8x32xf32>
    %190 = vector.extract_strided_slice %172 {offsets = [0, 64], sizes = [8, 32], strides = [1, 1]} : vector<8x96xf32> to vector<8x32xf32>
    %191 = vector.extract_strided_slice %173 {offsets = [0, 64], sizes = [8, 32], strides = [1, 1]} : vector<8x96xf32> to vector<8x32xf32>
    %192 = vector.broadcast %1 : vector<1x32xf32> to vector<8x32xf32>
    %193 = arith.addf %191, %192 : vector<8x32xf32>
    %194 = arith.mulf %181, %193 : vector<8x32xf32>
    %195 = arith.addf %190, %194 : vector<8x32xf32>
    %196 = math.tanh %195 : vector<8x32xf32>
    %cst_41 = arith.constant 1.000000e+00 : f32
    %197 = vector.broadcast %cst_41 : f32 to vector<8x32xf32>
    %198 = arith.subf %197, %189 : vector<8x32xf32>
    %199 = arith.mulf %198, %196 : vector<8x32xf32>
    %200 = arith.mulf %189, %171 : vector<8x32xf32>
    %201 = arith.addf %199, %200 : vector<8x32xf32>
    %202 = vector.extract_strided_slice %19 {offsets = [48, 0], sizes = [8, 96], strides = [1, 1]} : vector<64x96xf32> to vector<8x96xf32>
    %cst_42 = arith.constant dense<0.000000e+00> : vector<8x96xf32>
    %203 = tpu.matmul %201, %20, %cst_42 {dimension_numbers = #tpu.dot_dimension_numbers<[1], [0], [0], [1], [0, 0, 1, 1], [], []>} : vector<8x32xf32>, vector<32x96xf32>, vector<8x96xf32> -> vector<8x96xf32>
    %204 = vector.extract_strided_slice %202 {offsets = [0, 0], sizes = [8, 32], strides = [1, 1]} : vector<8x96xf32> to vector<8x32xf32>
    %205 = vector.extract_strided_slice %203 {offsets = [0, 0], sizes = [8, 32], strides = [1, 1]} : vector<8x96xf32> to vector<8x32xf32>
    %206 = arith.addf %204, %205 : vector<8x32xf32>
    %207 = arith.negf %206 : vector<8x32xf32>
    %208 = math.exp %207 : vector<8x32xf32>
    %cst_43 = arith.constant 1.000000e+00 : f32
    %209 = vector.broadcast %cst_43 : f32 to vector<8x32xf32>
    %210 = arith.addf %209, %208 : vector<8x32xf32>
    %211 = arith.divf %209, %210 : vector<8x32xf32>
    %212 = vector.extract_strided_slice %202 {offsets = [0, 32], sizes = [8, 32], strides = [1, 1]} : vector<8x96xf32> to vector<8x32xf32>
    %213 = vector.extract_strided_slice %203 {offsets = [0, 32], sizes = [8, 32], strides = [1, 1]} : vector<8x96xf32> to vector<8x32xf32>
    %214 = arith.addf %212, %213 : vector<8x32xf32>
    %215 = arith.negf %214 : vector<8x32xf32>
    %216 = math.exp %215 : vector<8x32xf32>
    %cst_44 = arith.constant 1.000000e+00 : f32
    %217 = vector.broadcast %cst_44 : f32 to vector<8x32xf32>
    %218 = arith.addf %217, %216 : vector<8x32xf32>
    %219 = arith.divf %217, %218 : vector<8x32xf32>
    %220 = vector.extract_strided_slice %202 {offsets = [0, 64], sizes = [8, 32], strides = [1, 1]} : vector<8x96xf32> to vector<8x32xf32>
    %221 = vector.extract_strided_slice %203 {offsets = [0, 64], sizes = [8, 32], strides = [1, 1]} : vector<8x96xf32> to vector<8x32xf32>
    %222 = vector.broadcast %1 : vector<1x32xf32> to vector<8x32xf32>
    %223 = arith.addf %221, %222 : vector<8x32xf32>
    %224 = arith.mulf %211, %223 : vector<8x32xf32>
    %225 = arith.addf %220, %224 : vector<8x32xf32>
    %226 = math.tanh %225 : vector<8x32xf32>
    %cst_45 = arith.constant 1.000000e+00 : f32
    %227 = vector.broadcast %cst_45 : f32 to vector<8x32xf32>
    %228 = arith.subf %227, %219 : vector<8x32xf32>
    %229 = arith.mulf %228, %226 : vector<8x32xf32>
    %230 = arith.mulf %219, %201 : vector<8x32xf32>
    %231 = arith.addf %229, %230 : vector<8x32xf32>
    %232 = vector.extract_strided_slice %19 {offsets = [56, 0], sizes = [8, 96], strides = [1, 1]} : vector<64x96xf32> to vector<8x96xf32>
    %cst_46 = arith.constant dense<0.000000e+00> : vector<8x96xf32>
    %233 = tpu.matmul %231, %20, %cst_46 {dimension_numbers = #tpu.dot_dimension_numbers<[1], [0], [0], [1], [0, 0, 1, 1], [], []>} : vector<8x32xf32>, vector<32x96xf32>, vector<8x96xf32> -> vector<8x96xf32>
    %234 = vector.extract_strided_slice %232 {offsets = [0, 0], sizes = [8, 32], strides = [1, 1]} : vector<8x96xf32> to vector<8x32xf32>
    %235 = vector.extract_strided_slice %233 {offsets = [0, 0], sizes = [8, 32], strides = [1, 1]} : vector<8x96xf32> to vector<8x32xf32>
    %236 = arith.addf %234, %235 : vector<8x32xf32>
    %237 = arith.negf %236 : vector<8x32xf32>
    %238 = math.exp %237 : vector<8x32xf32>
    %cst_47 = arith.constant 1.000000e+00 : f32
    %239 = vector.broadcast %cst_47 : f32 to vector<8x32xf32>
    %240 = arith.addf %239, %238 : vector<8x32xf32>
    %241 = arith.divf %239, %240 : vector<8x32xf32>
    %242 = vector.extract_strided_slice %232 {offsets = [0, 32], sizes = [8, 32], strides = [1, 1]} : vector<8x96xf32> to vector<8x32xf32>
    %243 = vector.extract_strided_slice %233 {offsets = [0, 32], sizes = [8, 32], strides = [1, 1]} : vector<8x96xf32> to vector<8x32xf32>
    %244 = arith.addf %242, %243 : vector<8x32xf32>
    %245 = arith.negf %244 : vector<8x32xf32>
    %246 = math.exp %245 : vector<8x32xf32>
    %cst_48 = arith.constant 1.000000e+00 : f32
    %247 = vector.broadcast %cst_48 : f32 to vector<8x32xf32>
    %248 = arith.addf %247, %246 : vector<8x32xf32>
    %249 = arith.divf %247, %248 : vector<8x32xf32>
    %250 = vector.extract_strided_slice %232 {offsets = [0, 64], sizes = [8, 32], strides = [1, 1]} : vector<8x96xf32> to vector<8x32xf32>
    %251 = vector.extract_strided_slice %233 {offsets = [0, 64], sizes = [8, 32], strides = [1, 1]} : vector<8x96xf32> to vector<8x32xf32>
    %252 = vector.broadcast %1 : vector<1x32xf32> to vector<8x32xf32>
    %253 = arith.addf %251, %252 : vector<8x32xf32>
    %254 = arith.mulf %241, %253 : vector<8x32xf32>
    %255 = arith.addf %250, %254 : vector<8x32xf32>
    %256 = math.tanh %255 : vector<8x32xf32>
    %cst_49 = arith.constant 1.000000e+00 : f32
    %257 = vector.broadcast %cst_49 : f32 to vector<8x32xf32>
    %258 = arith.subf %257, %249 : vector<8x32xf32>
    %259 = arith.mulf %258, %256 : vector<8x32xf32>
    %260 = arith.mulf %249, %231 : vector<8x32xf32>
    %261 = arith.addf %259, %260 : vector<8x32xf32>
    %c0_50 = arith.constant 0 : index
    %c0_51 = arith.constant 0 : index
    %c0_52 = arith.constant 0 : index
    %262 = vector.load %arg1[%c0_50, %c0_51, %c0_52] : memref<8x8x32xf32, #tpu.memory_space<vmem>>, vector<8x8x32xf32>
    %263 = arith.mulf %262, %262 : vector<8x8x32xf32>
    %cst_53 = arith.constant dense<0.000000e+00> : vector<8x32xf32>
    %264 = vector.multi_reduction <add>, %263, %cst_53 [1] : vector<8x8x32xf32> to vector<8x32xf32>
    %265 = vector.shape_cast %264 : vector<8x32xf32> to vector<8x1x32xf32>
    %cst_54 = arith.constant 1.000000e-24 : f32
    %266 = vector.broadcast %cst_54 : f32 to vector<8x1x32xf32>
    %267 = arith.maximumf %265, %266 : vector<8x1x32xf32>
    %268 = math.rsqrt %267 : vector<8x1x32xf32>
    %269 = vector.broadcast %268 : vector<8x1x32xf32> to vector<8x8x32xf32>
    %270 = arith.mulf %262, %269 : vector<8x8x32xf32>
    %271 = vector.shape_cast %270 : vector<8x8x32xf32> to vector<64x32xf32>
    %c64 = arith.constant 64 : index
    %c0_55 = arith.constant 0 : index
    %272 = vector.load %arg4[%c64, %c0_55] : memref<192x128xf32, #tpu.memory_space<vmem>>, vector<32x64xf32>
    %c32_56 = arith.constant 32 : index
    %c0_57 = arith.constant 0 : index
    %273 = vector.load %arg4[%c32_56, %c0_57] : memref<192x128xf32, #tpu.memory_space<vmem>>, vector<32x64xf32>
    %cst_58 = arith.constant dense<0.000000e+00> : vector<64x64xf32>
    %274 = tpu.matmul %271, %272, %cst_58 {dimension_numbers = #tpu.dot_dimension_numbers<[1], [0], [0], [1], [0, 0, 1, 1], [], []>} : vector<64x32xf32>, vector<32x64xf32>, vector<64x64xf32> -> vector<64x64xf32>
    %cst_59 = arith.constant dense<0.000000e+00> : vector<8x64xf32>
    %275 = tpu.matmul %261, %273, %cst_59 {dimension_numbers = #tpu.dot_dimension_numbers<[1], [0], [0], [1], [0, 0, 1, 1], [], []>} : vector<8x32xf32>, vector<32x64xf32>, vector<8x64xf32> -> vector<8x64xf32>
    %276 = vector.broadcast %2 : vector<1x64xf32> to vector<8x64xf32>
    %277 = arith.addf %275, %276 : vector<8x64xf32>
    %278 = vector.shape_cast %274 : vector<64x64xf32> to vector<8x8x64xf32>
    %279 = vector.shape_cast %277 : vector<8x64xf32> to vector<8x1x64xf32>
    %280 = vector.broadcast %279 : vector<8x1x64xf32> to vector<8x8x64xf32>
    %281 = arith.addf %278, %280 : vector<8x8x64xf32>
    %282 = vector.extract_strided_slice %281 {offsets = [0, 0, 0], sizes = [8, 8, 32], strides = [1, 1, 1]} : vector<8x8x64xf32> to vector<8x8x32xf32>
    %283 = math.tanh %282 : vector<8x8x32xf32>
    %284 = vector.extract_strided_slice %281 {offsets = [0, 0, 32], sizes = [8, 8, 32], strides = [1, 1, 1]} : vector<8x8x64xf32> to vector<8x8x32xf32>
    %285 = arith.negf %284 : vector<8x8x32xf32>
    %286 = math.exp %285 : vector<8x8x32xf32>
    %cst_60 = arith.constant 1.000000e+00 : f32
    %287 = vector.broadcast %cst_60 : f32 to vector<8x8x32xf32>
    %288 = arith.addf %287, %286 : vector<8x8x32xf32>
    %289 = arith.divf %287, %288 : vector<8x8x32xf32>
    %290 = arith.mulf %283, %289 : vector<8x8x32xf32>
    %291 = vector.shape_cast %3 : vector<1x32xf32> to vector<1x1x32xf32>
    %292 = vector.broadcast %291 : vector<1x1x32xf32> to vector<8x8x32xf32>
    %293 = arith.mulf %290, %292 : vector<8x8x32xf32>
    %cst_61 = arith.constant dense<0.000000e+00> : vector<8x8xf32>
    %294 = vector.multi_reduction <add>, %293, %cst_61 [2] : vector<8x8x32xf32> to vector<8x8xf32>
    %295 = vector.shape_cast %294 : vector<8x8xf32> to vector<8x8x1xf32>
    %296 = vector.shape_cast %4 : vector<1x1xf32> to vector<1x1x1xf32>
    %297 = vector.broadcast %296 : vector<1x1x1xf32> to vector<8x8x1xf32>
    %298 = arith.addf %295, %297 : vector<8x8x1xf32>
    %cst_62 = arith.constant dense<0xFF800000> : vector<8x1xf32>
    %299 = vector.multi_reduction <maximumf>, %298, %cst_62 [1] : vector<8x8x1xf32> to vector<8x1xf32>
    %300 = vector.shape_cast %299 : vector<8x1xf32> to vector<8x1x1xf32>
    %301 = vector.broadcast %300 : vector<8x1x1xf32> to vector<8x8x1xf32>
    %302 = arith.subf %298, %301 : vector<8x8x1xf32>
    %303 = math.exp %302 : vector<8x8x1xf32>
    %cst_63 = arith.constant dense<0.000000e+00> : vector<8x1xf32>
    %304 = vector.multi_reduction <add>, %303, %cst_63 [1] : vector<8x8x1xf32> to vector<8x1xf32>
    %305 = vector.shape_cast %304 : vector<8x1xf32> to vector<8x1x1xf32>
    %306 = tpu.reciprocal %305 {approx = true} : vector<8x1x1xf32> -> vector<8x1x1xf32>
    %307 = vector.broadcast %306 : vector<8x1x1xf32> to vector<8x8x1xf32>
    %308 = arith.mulf %303, %307 : vector<8x8x1xf32>
    %309 = vector.broadcast %308 : vector<8x8x1xf32> to vector<8x8x32xf32>
    %310 = arith.mulf %309, %270 : vector<8x8x32xf32>
    %cst_64 = arith.constant dense<0.000000e+00> : vector<8x32xf32>
    %311 = vector.multi_reduction <add>, %310, %cst_64 [1] : vector<8x8x32xf32> to vector<8x32xf32>
    %312 = tpu.concatenate %261, %311 in 0 : vector<8x32xf32>, vector<8x32xf32> -> vector<16x32xf32>
    %c96 = arith.constant 96 : index
    %c0_65 = arith.constant 0 : index
    %313 = vector.load %arg4[%c96, %c0_65] : memref<192x128xf32, #tpu.memory_space<vmem>>, vector<32x128xf32>
    %cst_66 = arith.constant dense<0.000000e+00> : vector<16x128xf32>
    %314 = tpu.matmul %312, %313, %cst_66 {dimension_numbers = #tpu.dot_dimension_numbers<[1], [0], [0], [1], [0, 0, 1, 1], [], []>} : vector<16x32xf32>, vector<32x128xf32>, vector<16x128xf32> -> vector<16x128xf32>
    %315 = vector.broadcast %5 : vector<1x128xf32> to vector<16x128xf32>
    %316 = arith.addf %314, %315 : vector<16x128xf32>
    %317 = vector.extract_strided_slice %316 {offsets = [0, 0], sizes = [8, 32], strides = [1, 1]} : vector<16x128xf32> to vector<8x32xf32>
    %318 = math.tanh %317 : vector<8x32xf32>
    %319 = vector.extract_strided_slice %316 {offsets = [0, 32], sizes = [8, 32], strides = [1, 1]} : vector<16x128xf32> to vector<8x32xf32>
    %320 = arith.negf %319 : vector<8x32xf32>
    %321 = math.exp %320 : vector<8x32xf32>
    %cst_67 = arith.constant 1.000000e+00 : f32
    %322 = vector.broadcast %cst_67 : f32 to vector<8x32xf32>
    %323 = arith.addf %322, %321 : vector<8x32xf32>
    %324 = arith.divf %322, %323 : vector<8x32xf32>
    %325 = arith.mulf %318, %324 : vector<8x32xf32>
    %326 = vector.extract_strided_slice %316 {offsets = [8, 64], sizes = [8, 32], strides = [1, 1]} : vector<16x128xf32> to vector<8x32xf32>
    %327 = math.tanh %326 : vector<8x32xf32>
    %328 = vector.extract_strided_slice %316 {offsets = [8, 96], sizes = [8, 32], strides = [1, 1]} : vector<16x128xf32> to vector<8x32xf32>
    %329 = arith.negf %328 : vector<8x32xf32>
    %330 = math.exp %329 : vector<8x32xf32>
    %cst_68 = arith.constant 1.000000e+00 : f32
    %331 = vector.broadcast %cst_68 : f32 to vector<8x32xf32>
    %332 = arith.addf %331, %330 : vector<8x32xf32>
    %333 = arith.divf %331, %332 : vector<8x32xf32>
    %334 = arith.mulf %327, %333 : vector<8x32xf32>
    %c128 = arith.constant 128 : index
    %c0_69 = arith.constant 0 : index
    %335 = vector.load %arg4[%c128, %c0_69] : memref<192x128xf32, #tpu.memory_space<vmem>>, vector<32x64xf32>
    %336 = arith.mulf %325, %334 : vector<8x32xf32>
    %cst_70 = arith.constant dense<0.000000e+00> : vector<8x64xf32>
    %337 = tpu.matmul %336, %335, %cst_70 {dimension_numbers = #tpu.dot_dimension_numbers<[1], [0], [0], [1], [0, 0, 1, 1], [], []>} : vector<8x32xf32>, vector<32x64xf32>, vector<8x64xf32> -> vector<8x64xf32>
    %338 = vector.broadcast %6 : vector<1x64xf32> to vector<8x64xf32>
    %339 = arith.addf %337, %338 : vector<8x64xf32>
    %340 = vector.extract_strided_slice %339 {offsets = [0, 0], sizes = [8, 32], strides = [1, 1]} : vector<8x64xf32> to vector<8x32xf32>
    %341 = math.tanh %340 : vector<8x32xf32>
    %342 = vector.extract_strided_slice %339 {offsets = [0, 32], sizes = [8, 32], strides = [1, 1]} : vector<8x64xf32> to vector<8x32xf32>
    %343 = arith.negf %342 : vector<8x32xf32>
    %344 = math.exp %343 : vector<8x32xf32>
    %cst_71 = arith.constant 1.000000e+00 : f32
    %345 = vector.broadcast %cst_71 : f32 to vector<8x32xf32>
    %346 = arith.addf %345, %344 : vector<8x32xf32>
    %347 = arith.divf %345, %346 : vector<8x32xf32>
    %348 = arith.mulf %341, %347 : vector<8x32xf32>
    %c160 = arith.constant 160 : index
    %c0_72 = arith.constant 0 : index
    %349 = vector.load %arg4[%c160, %c0_72] : memref<192x128xf32, #tpu.memory_space<vmem>>, vector<32x16xf32>
    %cst_73 = arith.constant dense<0.000000e+00> : vector<8x16xf32>
    %350 = tpu.matmul %348, %349, %cst_73 {dimension_numbers = #tpu.dot_dimension_numbers<[1], [0], [0], [1], [0, 0, 1, 1], [], []>} : vector<8x32xf32>, vector<32x16xf32>, vector<8x16xf32> -> vector<8x16xf32>
    %351 = vector.broadcast %7 : vector<1x16xf32> to vector<8x16xf32>
    %352 = arith.addf %350, %351 : vector<8x16xf32>
    %353 = vector.extract_strided_slice %352 {offsets = [0, 0], sizes = [2, 16], strides = [1, 1]} : vector<8x16xf32> to vector<2x16xf32>
    %c0_74 = arith.constant 0 : index
    %c0_75 = arith.constant 0 : index
    %354 = vector.load %arg6[%c0_74, %c0_75] : memref<2x16xf32, #tpu.memory_space<vmem>>, vector<2x16xf32>
    tpu.vector_store %arg6[%c0_74, %c0_75], %353 {strides = array<i32>} : memref<2x16xf32, #tpu.memory_space<vmem>>, vector<2x16xf32>,
    return
  }
}

</mosaic_0001>

<llo_original>
// kernel: model_forward.1
$region0: #{model_forward.1}
  #allocation0 [shape = 'u32[]', space=smem, size = 0x4, offset = 0x4, fixed_abs, tag = 'smem constant byte address 0x4 - core index']
  #allocation1 [shape = 'u32[72,128]{1,0:T(1,128)}', space=vmem, size = 0x9000, scoped, tag = 'internal scratch']
  %s0 = inlined_call_operand.vmem [shape: s32[64,1], index: 0, kind: input, shape index: {}]
  %s1 = inlined_call_operand.vmem [shape: f32[8,8,32], index: 1, kind: input, shape index: {}]
  %s2 = inlined_call_operand.vmem [shape: f32[50,300], index: 2, kind: input, shape index: {}]
  %s3 = inlined_call_operand.vmem [shape: f32[300,96], index: 3, kind: input, shape index: {}]
  %s4 = inlined_call_operand.vmem [shape: f32[192,128], index: 4, kind: input, shape index: {}]
  %s5 = inlined_call_operand.vmem [shape: f32[7,128], index: 5, kind: input, shape index: {}]
  %s6 = inlined_call_operand.hbm [shape: f32[2,16], index: 6, kind: output, shape index: {}]
  %s7 = sld [smem:[#allocation0]]
  $region34: #{model_forward.1} parent=0
    _
  %s9 = ssub.s32 1, %s7
  %s10 = scalar_select 0, %s9, %s7
  $region1: #{model_forward.1} parent=0
    #allocation2 [shape = 'u8[1024]{0}', space=vmem, size = 0x400, scoped, tag = 'output window, operand 0, single buffered']
    #allocation3 [shape = 's32[1]{0}', space=sflag, size = 0x4, scoped, tag = 'scoped memory for model_forward.1']
    %11 = vsyncpa [#allocation3], 0
    // Predicated region
    $region2: #{model_forward.1} parent=1 // pred_check
      _
    $region3: #{model_forward.1} parent=1 // pred_check_branch
      %13 = sbr.rel (0) target = $region5
    $region4: #{model_forward.1} parent=1 // pred_region
      _
    $region5: #{model_forward.1} parent=1 // pred_fallthru
      _
    // Predicated region
    $region6: #{model_forward.1} parent=1 // pred_check
      _
    $region7: #{model_forward.1} parent=1 // pred_check_branch
      %15 = sbr.rel (0) target = $region9
    $region8: #{model_forward.1} parent=1 // pred_region
      _
    $region9: #{model_forward.1} parent=1 // pred_fallthru
      _
    // Predicated region
    $region10: #{model_forward.1} parent=1 // pred_check
      _
    $region11: #{model_forward.1} parent=1 // pred_check_branch
      %17 = sbr.rel (0) target = $region13
    $region12: #{model_forward.1} parent=1 // pred_region
      _
    $region13: #{model_forward.1} parent=1 // pred_fallthru
      _
    // Predicated region
    $region14: #{model_forward.1} parent=1 // pred_check
      _
    $region15: #{model_forward.1} parent=1 // pred_check_branch
      %19 = sbr.rel (0) target = $region17
    $region16: #{model_forward.1} parent=1 // pred_region
      _
    $region17: #{model_forward.1} parent=1 // pred_fallthru
      _
    // Predicated region
    $region18: #{model_forward.1} parent=1 // pred_check
      _
    $region19: #{model_forward.1} parent=1 // pred_check_branch
      %21 = sbr.rel (0) target = $region21
    $region20: #{model_forward.1} parent=1 // pred_region
      _
    $region21: #{model_forward.1} parent=1 // pred_fallthru
      _
    // Predicated region
    $region22: #{model_forward.1} parent=1 // pred_check
      _
    $region23: #{model_forward.1} parent=1 // pred_check_branch
      %23 = sbr.rel (0) target = $region25
    $region24: #{model_forward.1} parent=1 // pred_region
      _
    $region25: #{model_forward.1} parent=1 // pred_fallthru
      _
    %v24 = vld [vmem:[%s5] sm:$0x1]
    %v25 = vld [vmem:[%s5 + $0x1] sm:$0x1]
    %v26 = vld [vmem:[%s5 + $0x2] sm:$0x1]
    %v27 = vld [vmem:[%s5 + $0x3] sm:$0x1]
    %v28 = vld [vmem:[%s5 + $0x4] sm:$0x1]
    %v29 = vld [vmem:[%s5 + $0x5] sm:$0x1]
    %v30 = vld [vmem:[%s5 + $0x6] sm:$0x1]
    %v31 = vld [vmem:[%s0] sm:$0xff]
    %v32 = vld [vmem:[%s0 + $0x8] sm:$0xff]
    %v33 = vld [vmem:[%s0 + $0x10] sm:$0xff]
    %v34 = vld [vmem:[%s0 + $0x18] sm:$0xff]
    %v35 = vld [vmem:[%s0 + $0x20] sm:$0xff]
    %v36 = vld [vmem:[%s0 + $0x28] sm:$0xff]
    %v37 = vld [vmem:[%s0 + $0x30] sm:$0xff]
    %v38 = vld [vmem:[%s0 + $0x38] sm:$0xff]
    %v39 = vlaneseq
    %v40 = vand.u32 %v39, 127
    %41 = vset.pattern.permute.xlu0 0
    %42 = vperm.xlu0 %41, %v31
    %v43 = vpop.permute.xlu0 %42
    %44 = vset.pattern.permute.xlu0 0
    %45 = vperm.xlu0 %44, %v32
    %v46 = vpop.permute.xlu0 %45
    %47 = vset.pattern.permute.xlu0 0
    %48 = vperm.xlu0 %47, %v33
    %v49 = vpop.permute.xlu0 %48
    %50 = vset.pattern.permute.xlu0 0
    %51 = vperm.xlu0 %50, %v34
    %v52 = vpop.permute.xlu0 %51
    %53 = vset.pattern.permute.xlu0 0
    %54 = vperm.xlu0 %53, %v35
    %v55 = vpop.permute.xlu0 %54
    %56 = vset.pattern.permute.xlu0 0
    %57 = vperm.xlu0 %56, %v36
    %v58 = vpop.permute.xlu0 %57
    %59 = vset.pattern.permute.xlu0 0
    %60 = vperm.xlu0 %59, %v37
    %v61 = vpop.permute.xlu0 %60
    %62 = vset.pattern.permute.xlu0 0
    %63 = vperm.xlu0 %62, %v38
    %v64 = vpop.permute.xlu0 %63
    %vm65 = vcmp.eq.s32.totalorder %v40, %v43
    %vm66 = vcmp.eq.s32.totalorder %v40, %v46
    %vm67 = vcmp.eq.s32.totalorder %v40, %v49
    %vm68 = vcmp.eq.s32.totalorder %v40, %v52
    %vm69 = vcmp.eq.s32.totalorder %v40, %v55
    %vm70 = vcmp.eq.s32.totalorder %v40, %v58
    %vm71 = vcmp.eq.s32.totalorder %v40, %v61
    %vm72 = vcmp.eq.s32.totalorder %v40, %v64
    %v73 = vsel %vm65, 1, 0
    %v74 = vsel %vm66, 1, 0
    %v75 = vsel %vm67, 1, 0
    %v76 = vsel %vm68, 1, 0
    %v77 = vsel %vm69, 1, 0
    %v78 = vsel %vm70, 1, 0
    %v79 = vsel %vm71, 1, 0
    %v80 = vsel %vm72, 1, 0
    %v81 = vcvt.s32.f32 %v73
    %v82 = vcvt.s32.f32 %v74
    %v83 = vcvt.s32.f32 %v75
    %v84 = vcvt.s32.f32 %v76
    %v85 = vcvt.s32.f32 %v77
    %v86 = vcvt.s32.f32 %v78
    %v87 = vcvt.s32.f32 %v79
    %v88 = vcvt.s32.f32 %v80
    %v89 = vld [vmem:[%s2] sm:$0xff]
    %v90 = vld [vmem:[%s2 + $0x8] sm:$0xff]
    %v91 = vld [vmem:[%s2 + $0x10] sm:$0xff]
    %v92 = vld [vmem:[%s2 + $0x18] sm:$0xff]
    %v93 = vld [vmem:[%s2 + $0x20] sm:$0xff]
    %v94 = vld [vmem:[%s2 + $0x28] sm:$0xff]
    %v95 = vld [vmem:[%s2 + $0x30] sm:$0xff]
    %v96 = vld [vmem:[%s2 + $0x38] sm:$0xff]
    %v97 = vld [vmem:[%s2 + $0x40] sm:$0xff]
    %v98 = vld [vmem:[%s2 + $0x48] sm:$0xff]
    %v99 = vld [vmem:[%s2 + $0x50] sm:$0xff]
    %v100 = vld [vmem:[%s2 + $0x58] sm:$0xff]
    %v101 = vld [vmem:[%s2 + $0x60] sm:$0xff]
    %v102 = vld [vmem:[%s2 + $0x68] sm:$0xff]
    %v103 = vld [vmem:[%s2 + $0x70] sm:$0xff]
    %v104 = vld [vmem:[%s2 + $0x78] sm:$0xff]
    %v105 = vld [vmem:[%s2 + $0x80] sm:$0xff]
    %v106 = vld [vmem:[%s2 + $0x88] sm:$0xff]
    %v107 = vld [vmem:[%s2 + $0x90] sm:$0x3]
    %v108 = vld [vmem:[%s2 + $0x98] sm:$0x3]
    %v109 = vld [vmem:[%s2 + $0xa0] sm:$0x3]
    %vm110 = vcmask 408576
    %v112 = vsel %vm110, %v81, 0
    %v115 = vsel %vm110, %v82, 0
    %v118 = vsel %vm110, %v83, 0
    %v121 = vsel %vm110, %v84, 0
    %v124 = vsel %vm110, %v85, 0
    %v127 = vsel %vm110, %v86, 0
    %v130 = vsel %vm110, %v87, 0
    %v133 = vsel %vm110, %v88, 0
    %vm135 = vcmask 1041408
    %v137 = vsel %vm135, %v107, 0
    %v140 = vsel %vm135, %v108, 0
    %v143 = vsel %vm135, %v109, 0
    %145 = vmatpush.msra.mxu0 0.0
    %146 = vmatpush.msra.mxu0 0.0
    %147 = vmatpush.msra.mxu0 0.0
    %148 = vmatpush.msra.mxu0 0.0
    %149 = vmatpush.msra.mxu0 0.0
    %150 = vmatpush.msra.mxu0 0.0
    %151 = vmatpush.msra.mxu0 0.0
    %152 = vmatpush.msra.mxu0 0.0
    %153 = vmatpush.msra.mxu0 0.0
    %154 = vmatpush.msra.mxu0 %v137
    %155 = vmatpush.msra.mxu0 %v104
    %156 = vmatpush.msra.mxu0 %v101
    %157 = vmatpush.msra.mxu0 %v98
    %158 = vmatpush.msra.mxu0 %v95
    %159 = vmatpush.msra.mxu0 %v92
    %160 = vmatpush.msra.mxu0 %v89
    %161 = vmatmul.f32.gmra.mxu0 %v112
    %v162 = vpop.f32.mrf.mxu0
    %v163 = vadd.f32 0.0, %v162
    %164 = vmatmul.f32.gmra.mxu0 %v115
    %v165 = vpop.f32.mrf.mxu0
    %v166 = vadd.f32 0.0, %v165
    %167 = vmatmul.f32.gmra.mxu0 %v118
    %v168 = vpop.f32.mrf.mxu0
    %v169 = vadd.f32 0.0, %v168
    %170 = vmatmul.f32.gmra.mxu0 %v121
    %v171 = vpop.f32.mrf.mxu0
    %v172 = vadd.f32 0.0, %v171
    %173 = vmatmul.f32.gmra.mxu0 %v124
    %v174 = vpop.f32.mrf.mxu0
    %v175 = vadd.f32 0.0, %v174
    %176 = vmatmul.f32.gmra.mxu0 %v127
    %v177 = vpop.f32.mrf.mxu0
    %v178 = vadd.f32 0.0, %v177
    %179 = vmatmul.f32.gmra.mxu0 %v130
    %v180 = vpop.f32.mrf.mxu0
    %v181 = vadd.f32 0.0, %v180
    %182 = vmatmul.f32.gmra.mxu0 %v133
    %v183 = vpop.f32.mrf.mxu0
    %v184 = vadd.f32 0.0, %v183
    %185 = vdwg.mxu0
    %186 = vmatpush.msra.mxu0 0.0
    %187 = vmatpush.msra.mxu0 0.0
    %188 = vmatpush.msra.mxu0 0.0
    %189 = vmatpush.msra.mxu0 0.0
    %190 = vmatpush.msra.mxu0 0.0
    %191 = vmatpush.msra.mxu0 0.0
    %192 = vmatpush.msra.mxu0 0.0
    %193 = vmatpush.msra.mxu0 0.0
    %194 = vmatpush.msra.mxu0 0.0
    %195 = vmatpush.msra.mxu0 %v140
    %196 = vmatpush.msra.mxu0 %v105
    %197 = vmatpush.msra.mxu0 %v102
    %198 = vmatpush.msra.mxu0 %v99
    %199 = vmatpush.msra.mxu0 %v96
    %200 = vmatpush.msra.mxu0 %v93
    %201 = vmatpush.msra.mxu0 %v90
    %202 = vmatmul.f32.gmra.mxu0 %v112
    %v203 = vpop.f32.mrf.mxu0
    %v204 = vadd.f32 0.0, %v203
    %205 = vmatmul.f32.gmra.mxu0 %v115
    %v206 = vpop.f32.mrf.mxu0
    %v207 = vadd.f32 0.0, %v206
    %208 = vmatmul.f32.gmra.mxu0 %v118
    %v209 = vpop.f32.mrf.mxu0
    %v210 = vadd.f32 0.0, %v209
    %211 = vmatmul.f32.gmra.mxu0 %v121
    %v212 = vpop.f32.mrf.mxu0
    %v213 = vadd.f32 0.0, %v212
    %214 = vmatmul.f32.gmra.mxu0 %v124
    %v215 = vpop.f32.mrf.mxu0
    %v216 = vadd.f32 0.0, %v215
    %217 = vmatmul.f32.gmra.mxu0 %v127
    %v218 = vpop.f32.mrf.mxu0
    %v219 = vadd.f32 0.0, %v218
    %220 = vmatmul.f32.gmra.mxu0 %v130
    %v221 = vpop.f32.mrf.mxu0
    %v222 = vadd.f32 0.0, %v221
    %223 = vmatmul.f32.gmra.mxu0 %v133
    %v224 = vpop.f32.mrf.mxu0
    %v225 = vadd.f32 0.0, %v224
    %226 = vdwg.mxu0
    %227 = vmatpush.msra.mxu0 0.0
    %228 = vmatpush.msra.mxu0 0.0
    %229 = vmatpush.msra.mxu0 0.0
    %230 = vmatpush.msra.mxu0 0.0
    %231 = vmatpush.msra.mxu0 0.0
    %232 = vmatpush.msra.mxu0 0.0
    %233 = vmatpush.msra.mxu0 0.0
    %234 = vmatpush.msra.mxu0 0.0
    %235 = vmatpush.msra.mxu0 0.0
    %236 = vmatpush.msra.mxu0 %v143
    %237 = vmatpush.msra.mxu0 %v106
    %238 = vmatpush.msra.mxu0 %v103
    %239 = vmatpush.msra.mxu0 %v100
    %240 = vmatpush.msra.mxu0 %v97
    %241 = vmatpush.msra.mxu0 %v94
    %242 = vmatpush.msra.mxu0 %v91
    %243 = vmatmul.f32.gmra.mxu0 %v112
    %v244 = vpop.f32.mrf.mxu0
    %v245 = vadd.f32 0.0, %v244
    %246 = vmatmul.f32.gmra.mxu0 %v115
    %v247 = vpop.f32.mrf.mxu0
    %v248 = vadd.f32 0.0, %v247
    %249 = vmatmul.f32.gmra.mxu0 %v118
    %v250 = vpop.f32.mrf.mxu0
    %v251 = vadd.f32 0.0, %v250
    %252 = vmatmul.f32.gmra.mxu0 %v121
    %v253 = vpop.f32.mrf.mxu0
    %v254 = vadd.f32 0.0, %v253
    %255 = vmatmul.f32.gmra.mxu0 %v124
    %v256 = vpop.f32.mrf.mxu0
    %v257 = vadd.f32 0.0, %v256
    %258 = vmatmul.f32.gmra.mxu0 %v127
    %v259 = vpop.f32.mrf.mxu0
    %v260 = vadd.f32 0.0, %v259
    %261 = vmatmul.f32.gmra.mxu0 %v130
    %v262 = vpop.f32.mrf.mxu0
    %v263 = vadd.f32 0.0, %v262
    %264 = vmatmul.f32.gmra.mxu0 %v133
    %v265 = vpop.f32.mrf.mxu0
    %v266 = vadd.f32 0.0, %v265
    %267 = vdwg.mxu0
    %v268 = vld [vmem:[%s3] sm:$0xff]
    %v269 = vld [vmem:[%s3 + $0x8] sm:$0xff]
    %v270 = vld [vmem:[%s3 + $0x10] sm:$0xff]
    %v271 = vld [vmem:[%s3 + $0x18] sm:$0xff]
    %v272 = vld [vmem:[%s3 + $0x20] sm:$0xff]
    %v273 = vld [vmem:[%s3 + $0x28] sm:$0xff]
    %v274 = vld [vmem:[%s3 + $0x30] sm:$0xff]
    %v275 = vld [vmem:[%s3 + $0x38] sm:$0xff]
    %v276 = vld [vmem:[%s3 + $0x40] sm:$0xff]
    %v277 = vld [vmem:[%s3 + $0x48] sm:$0xff]
    %v278 = vld [vmem:[%s3 + $0x50] sm:$0xff]
    %v279 = vld [vmem:[%s3 + $0x58] sm:$0xff]
    %v280 = vld [vmem:[%s3 + $0x60] sm:$0xff]
    %v281 = vld [vmem:[%s3 + $0x68] sm:$0xff]
    %v282 = vld [vmem:[%s3 + $0x70] sm:$0xff]
    %v283 = vld [vmem:[%s3 + $0x78] sm:$0xff]
    %v284 = vld [vmem:[%s3 + $0x80] sm:$0xff]
    %v285 = vld [vmem:[%s3 + $0x88] sm:$0xff]
    %v286 = vld [vmem:[%s3 + $0x90] sm:$0xff]
    %v287 = vld [vmem:[%s3 + $0x98] sm:$0xff]
    %v288 = vld [vmem:[%s3 + $0xa0] sm:$0xff]
    %v289 = vld [vmem:[%s3 + $0xa8] sm:$0xff]
    %v290 = vld [vmem:[%s3 + $0xb0] sm:$0xff]
    %v291 = vld [vmem:[%s3 + $0xb8] sm:$0xff]
    %v292 = vld [vmem:[%s3 + $0xc0] sm:$0xff]
    %v293 = vld [vmem:[%s3 + $0xc8] sm:$0xff]
    %v294 = vld [vmem:[%s3 + $0xd0] sm:$0xff]
    %v295 = vld [vmem:[%s3 + $0xd8] sm:$0xff]
    %v296 = vld [vmem:[%s3 + $0xe0] sm:$0xff]
    %v297 = vld [vmem:[%s3 + $0xe8] sm:$0xff]
    %v298 = vld [vmem:[%s3 + $0xf0] sm:$0xff]
    %v299 = vld [vmem:[%s3 + $0xf8] sm:$0xff]
    %v300 = vld [vmem:[%s3 + $0x100] sm:$0xff]
    %v301 = vld [vmem:[%s3 + $0x108] sm:$0xff]
    %v302 = vld [vmem:[%s3 + $0x110] sm:$0xff]
    %v303 = vld [vmem:[%s3 + $0x118] sm:$0xff]
    %v304 = vld [vmem:[%s3 + $0x120] sm:$0xff]
    %v305 = vld [vmem:[%s3 + $0x128] sm:$0xf]
    %v306 = vperm.slane %v24, 0
    %vm307 = vcmask 359424
    %v309 = vsel %vm307, %v245, 0
    %v312 = vsel %vm307, %v248, 0
    %v315 = vsel %vm307, %v251, 0
    %v318 = vsel %vm307, %v254, 0
    %v321 = vsel %vm307, %v257, 0
    %v324 = vsel %vm307, %v260, 0
    %v327 = vsel %vm307, %v263, 0
    %v330 = vsel %vm307, %v266, 0
    %vm332 = vcmask 1043456
    %v334 = vsel %vm332, %v305, 0
    %336 = vmatpush.msra.mxu0 %v283
    %337 = vmatpush.msra.mxu0 %v282
    %338 = vmatpush.msra.mxu0 %v281
    %339 = vmatpush.msra.mxu0 %v280
    %340 = vmatpush.msra.mxu0 %v279
    %341 = vmatpush.msra.mxu0 %v278
    %342 = vmatpush.msra.mxu0 %v277
    %343 = vmatpush.msra.mxu0 %v276
    %344 = vmatpush.msra.mxu0 %v275
    %345 = vmatpush.msra.mxu0 %v274
    %346 = vmatpush.msra.mxu0 %v273
    %347 = vmatpush.msra.mxu0 %v272
    %348 = vmatpush.msra.mxu0 %v271
    %349 = vmatpush.msra.mxu0 %v270
    %350 = vmatpush.msra.mxu0 %v269
    %351 = vmatpush.msra.mxu0 %v268
    %352 = vmatmul.f32.gmra.mxu0 %v163
    %v353 = vpop.f32.mrf.mxu0
    %v354 = vadd.f32 %v306, %v353
    %355 = vmatmul.f32.gmra.mxu0 %v166
    %v356 = vpop.f32.mrf.mxu0
    %v357 = vadd.f32 %v306, %v356
    %358 = vmatmul.f32.gmra.mxu0 %v169
    %v359 = vpop.f32.mrf.mxu0
    %v360 = vadd.f32 %v306, %v359
    %361 = vmatmul.f32.gmra.mxu0 %v172
    %v362 = vpop.f32.mrf.mxu0
    %v363 = vadd.f32 %v306, %v362
    %364 = vmatmul.f32.gmra.mxu0 %v175
    %v365 = vpop.f32.mrf.mxu0
    %v366 = vadd.f32 %v306, %v365
    %367 = vmatmul.f32.gmra.mxu0 %v178
    %v368 = vpop.f32.mrf.mxu0
    %v369 = vadd.f32 %v306, %v368
    %370 = vmatmul.f32.gmra.mxu0 %v181
    %v371 = vpop.f32.mrf.mxu0
    %v372 = vadd.f32 %v306, %v371
    %373 = vmatmul.f32.gmra.mxu0 %v184
    %v374 = vpop.f32.mrf.mxu0
    %v375 = vadd.f32 %v306, %v374
    %376 = vdwg.mxu0
    %377 = vmatpush.msra.mxu0 %v299
    %378 = vmatpush.msra.mxu0 %v298
    %379 = vmatpush.msra.mxu0 %v297
    %380 = vmatpush.msra.mxu0 %v296
    %381 = vmatpush.msra.mxu0 %v295
    %382 = vmatpush.msra.mxu0 %v294
    %383 = vmatpush.msra.mxu0 %v293
    %384 = vmatpush.msra.mxu0 %v292
    %385 = vmatpush.msra.mxu0 %v291
    %386 = vmatpush.msra.mxu0 %v290
    %387 = vmatpush.msra.mxu0 %v289
    %388 = vmatpush.msra.mxu0 %v288
    %389 = vmatpush.msra.mxu0 %v287
    %390 = vmatpush.msra.mxu0 %v286
    %391 = vmatpush.msra.mxu0 %v285
    %392 = vmatpush.msra.mxu0 %v284
    %393 = vmatmul.f32.gmra.mxu0 %v204
    %v394 = vpop.f32.mrf.mxu0
    %v395 = vadd.f32 %v354, %v394
    %396 = vmatmul.f32.gmra.mxu0 %v207
    %v397 = vpop.f32.mrf.mxu0
    %v398 = vadd.f32 %v357, %v397
    %399 = vmatmul.f32.gmra.mxu0 %v210
    %v400 = vpop.f32.mrf.mxu0
    %v401 = vadd.f32 %v360, %v400
    %402 = vmatmul.f32.gmra.mxu0 %v213
    %v403 = vpop.f32.mrf.mxu0
    %v404 = vadd.f32 %v363, %v403
    %405 = vmatmul.f32.gmra.mxu0 %v216
    %v406 = vpop.f32.mrf.mxu0
    %v407 = vadd.f32 %v366, %v406
    %408 = vmatmul.f32.gmra.mxu0 %v219
    %v409 = vpop.f32.mrf.mxu0
    %v410 = vadd.f32 %v369, %v409
    %411 = vmatmul.f32.gmra.mxu0 %v222
    %v412 = vpop.f32.mrf.mxu0
    %v413 = vadd.f32 %v372, %v412
    %414 = vmatmul.f32.gmra.mxu0 %v225
    %v415 = vpop.f32.mrf.mxu0
    %v416 = vadd.f32 %v375, %v415
    %417 = vdwg.mxu0
    %418 = vmatpush.msra.mxu0 0.0
    %419 = vmatpush.msra.mxu0 0.0
    %420 = vmatpush.msra.mxu0 0.0
    %421 = vmatpush.msra.mxu0 0.0
    %422 = vmatpush.msra.mxu0 0.0
    %423 = vmatpush.msra.mxu0 0.0
    %424 = vmatpush.msra.mxu0 0.0
    %425 = vmatpush.msra.mxu0 0.0
    %426 = vmatpush.msra.mxu0 0.0
    %427 = vmatpush.msra.mxu0 0.0
    %428 = vmatpush.msra.mxu0 %v334
    %429 = vmatpush.msra.mxu0 %v304
    %430 = vmatpush.msra.mxu0 %v303
    %431 = vmatpush.msra.mxu0 %v302
    %432 = vmatpush.msra.mxu0 %v301
    %433 = vmatpush.msra.mxu0 %v300
    %434 = vmatmul.f32.gmra.mxu0 %v309
    %v435 = vpop.f32.mrf.mxu0
    %v436 = vadd.f32 %v395, %v435
    %437 = vmatmul.f32.gmra.mxu0 %v312
    %v438 = vpop.f32.mrf.mxu0
    %v439 = vadd.f32 %v398, %v438
    %440 = vmatmul.f32.gmra.mxu0 %v315
    %v441 = vpop.f32.mrf.mxu0
    %v442 = vadd.f32 %v401, %v441
    %443 = vmatmul.f32.gmra.mxu0 %v318
    %v444 = vpop.f32.mrf.mxu0
    %v445 = vadd.f32 %v404, %v444
    %446 = vmatmul.f32.gmra.mxu0 %v321
    %v447 = vpop.f32.mrf.mxu0
    %v448 = vadd.f32 %v407, %v447
    %449 = vmatmul.f32.gmra.mxu0 %v324
    %v450 = vpop.f32.mrf.mxu0
    %v451 = vadd.f32 %v410, %v450
    %452 = vmatmul.f32.gmra.mxu0 %v327
    %v453 = vpop.f32.mrf.mxu0
    %v454 = vadd.f32 %v413, %v453
    %455 = vmatmul.f32.gmra.mxu0 %v330
    %v456 = vpop.f32.mrf.mxu0
    %v457 = vadd.f32 %v416, %v456
    %458 = vdwg.mxu0
    %v459 = vld [vmem:[%s4] sm:$0xff]
    %v460 = vld [vmem:[%s4 + $0x8] sm:$0xff]
    %v461 = vld [vmem:[%s4 + $0x10] sm:$0xff]
    %v462 = vld [vmem:[%s4 + $0x18] sm:$0xff]
    %vm463 = vcmask 261120
    %v465 = vsel %vm463, 0.0, 0
    %467 = vmatpush.msra.mxu0 0.0
    %468 = vmatpush.msra.mxu0 0.0
    %469 = vmatpush.msra.mxu0 0.0
    %470 = vmatpush.msra.mxu0 0.0
    %471 = vmatpush.msra.mxu0 0.0
    %472 = vmatpush.msra.mxu0 0.0
    %473 = vmatpush.msra.mxu0 0.0
    %474 = vmatpush.msra.mxu0 0.0
    %475 = vmatpush.msra.mxu0 0.0
    %476 = vmatpush.msra.mxu0 0.0
    %477 = vmatpush.msra.mxu0 0.0
    %478 = vmatpush.msra.mxu0 0.0
    %479 = vmatpush.msra.mxu0 %v462
    %480 = vmatpush.msra.mxu0 %v461
    %481 = vmatpush.msra.mxu0 %v460
    %482 = vmatpush.msra.mxu0 %v459
    %483 = vmatmul.f32.gmra.mxu0 %v465
    %v484 = vpop.f32.mrf.mxu0
    %v485 = vadd.f32 0.0, %v484
    %486 = vdwg.mxu0
    %v487 = vadd.f32 %v436, %v485
    %v488 = vxor.u32 %v487, 2147483648
    %v489 = vmul.f32 %v488, 1.442695
    %v490 = vpow.pop %v489
    %v491 = vadd.f32 %v490, 1.0
    %v492 = vrcp.pop %v491
    %v493 = vmul.f32 %v491, %v492
    %v494 = vsub.f32 1.0, %v493
    %v495 = vmul.f32 %v492, %v494
    %v496 = vadd.f32 %v492, %v495
    %vm497 = vweird.f32 %v491
    %vm498 = vweird.f32 %v492
    %vm499 = vmor %vm497, %vm498
    %v500 = vsel %vm499, %v492, %v496
    %v501 = vand.u32 2147483647, %v491
    %vm502 = vcmp.eq.f32.partialorder %v501, 8.507059e+37
    %v503 = vand.u32 %v491, 2147483648
    %v504 = vor.u32 1.1754944e-38, %v503
    %v505 = vsel %vm502, %v504, %v500
    %v506 = vmul.f32 1.0, %v505
    %v507 = vperm.slane %v25, 0
    %509 = vrot.lane.b32.xlu0 %v507, 64
    %v510 = vpop.permute.xlu0 %509
    %v512 = vadd.f32 %v485, %v510
    %514 = vrot.lane.b32.xlu0 %v512, 64
    %v515 = vpop.permute.xlu0 %514
    %v517 = vmul.f32 %v506, %v515
    %519 = vrot.lane.b32.xlu0 %v517, 64
    %v520 = vpop.permute.xlu0 %519
    %v522 = vadd.f32 %v436, %v520
    %v523 = vtanh.pop %v522
    %v524 = vsub.f32 1.0, %v506
    %526 = vrot.lane.b32.xlu0 %v523, 96
    %v527 = vpop.permute.xlu0 %526
    %v529 = vmul.f32 %v524, %v527
    %v530 = vmul.f32 %v506, 0.0
    %v531 = vadd.f32 %v529, %v530
    %533 = vrot.lane.b32.xlu0 %v531, 96
    %v534 = vpop.permute.xlu0 %533
    %v535 = vsel %vm463, %v534, 0
    %537 = vmatpush.msra.mxu0 0.0
    %538 = vmatpush.msra.mxu0 0.0
    %539 = vmatpush.msra.mxu0 0.0
    %540 = vmatpush.msra.mxu0 0.0
    %541 = vmatpush.msra.mxu0 0.0
    %542 = vmatpush.msra.mxu0 0.0
    %543 = vmatpush.msra.mxu0 0.0
    %544 = vmatpush.msra.mxu0 0.0
    %545 = vmatpush.msra.mxu0 0.0
    %546 = vmatpush.msra.mxu0 0.0
    %547 = vmatpush.msra.mxu0 0.0
    %548 = vmatpush.msra.mxu0 0.0
    %549 = vmatpush.msra.mxu0 %v462
    %550 = vmatpush.msra.mxu0 %v461
    %551 = vmatpush.msra.mxu0 %v460
    %552 = vmatpush.msra.mxu0 %v459
    %553 = vmatmul.f32.gmra.mxu0 %v535
    %v554 = vpop.f32.mrf.mxu0
    %v555 = vadd.f32 0.0, %v554
    %556 = vdwg.mxu0
    %v557 = vadd.f32 %v439, %v555
    %v558 = vxor.u32 %v557, 2147483648
    %v559 = vmul.f32 %v558, 1.442695
    %v560 = vpow.pop %v559
    %v561 = vadd.f32 %v560, 1.0
    %v562 = vrcp.pop %v561
    %v563 = vmul.f32 %v561, %v562
    %v564 = vsub.f32 1.0, %v563
    %v565 = vmul.f32 %v562, %v564
    %v566 = vadd.f32 %v562, %v565
    %vm567 = vweird.f32 %v561
    %vm568 = vweird.f32 %v562
    %vm569 = vmor %vm567, %vm568
    %v570 = vsel %vm569, %v562, %v566
    %v571 = vand.u32 2147483647, %v561
    %vm572 = vcmp.eq.f32.partialorder %v571, 8.507059e+37
    %v573 = vand.u32 %v561, 2147483648
    %v574 = vor.u32 1.1754944e-38, %v573
    %v575 = vsel %vm572, %v574, %v570
    %v576 = vmul.f32 1.0, %v575
    %v577 = vadd.f32 %v555, %v510
    %579 = vrot.lane.b32.xlu0 %v577, 64
    %v580 = vpop.permute.xlu0 %579
    %v582 = vmul.f32 %v576, %v580
    %584 = vrot.lane.b32.xlu0 %v582, 64
    %v585 = vpop.permute.xlu0 %584
    %v587 = vadd.f32 %v439, %v585
    %v588 = vtanh.pop %v587
    %v589 = vsub.f32 1.0, %v576
    %591 = vrot.lane.b32.xlu0 %v588, 96
    %v592 = vpop.permute.xlu0 %591
    %v594 = vmul.f32 %v589, %v592
    %v595 = vmul.f32 %v576, %v531
    %v596 = vadd.f32 %v594, %v595
    %598 = vrot.lane.b32.xlu0 %v596, 96
    %v599 = vpop.permute.xlu0 %598
    %v600 = vsel %vm463, %v599, 0
    %602 = vmatpush.msra.mxu0 0.0
    %603 = vmatpush.msra.mxu0 0.0
    %604 = vmatpush.msra.mxu0 0.0
    %605 = vmatpush.msra.mxu0 0.0
    %606 = vmatpush.msra.mxu0 0.0
    %607 = vmatpush.msra.mxu0 0.0
    %608 = vmatpush.msra.mxu0 0.0
    %609 = vmatpush.msra.mxu0 0.0
    %610 = vmatpush.msra.mxu0 0.0
    %611 = vmatpush.msra.mxu0 0.0
    %612 = vmatpush.msra.mxu0 0.0
    %613 = vmatpush.msra.mxu0 0.0
    %614 = vmatpush.msra.mxu0 %v462
    %615 = vmatpush.msra.mxu0 %v461
    %616 = vmatpush.msra.mxu0 %v460
    %617 = vmatpush.msra.mxu0 %v459
    %618 = vmatmul.f32.gmra.mxu0 %v600
    %v619 = vpop.f32.mrf.mxu0
    %v620 = vadd.f32 0.0, %v619
    %621 = vdwg.mxu0
    %v622 = vadd.f32 %v442, %v620
    %v623 = vxor.u32 %v622, 2147483648
    %v624 = vmul.f32 %v623, 1.442695
    %v625 = vpow.pop %v624
    %v626 = vadd.f32 %v625, 1.0
    %v627 = vrcp.pop %v626
    %v628 = vmul.f32 %v626, %v627
    %v629 = vsub.f32 1.0, %v628
    %v630 = vmul.f32 %v627, %v629
    %v631 = vadd.f32 %v627, %v630
    %vm632 = vweird.f32 %v626
    %vm633 = vweird.f32 %v627
    %vm634 = vmor %vm632, %vm633
    %v635 = vsel %vm634, %v627, %v631
    %v636 = vand.u32 2147483647, %v626
    %vm637 = vcmp.eq.f32.partialorder %v636, 8.507059e+37
    %v638 = vand.u32 %v626, 2147483648
    %v639 = vor.u32 1.1754944e-38, %v638
    %v640 = vsel %vm637, %v639, %v635
    %v641 = vmul.f32 1.0, %v640
    %v642 = vadd.f32 %v620, %v510
    %644 = vrot.lane.b32.xlu0 %v642, 64
    %v645 = vpop.permute.xlu0 %644
    %v647 = vmul.f32 %v641, %v645
    %649 = vrot.lane.b32.xlu0 %v647, 64
    %v650 = vpop.permute.xlu0 %649
    %v652 = vadd.f32 %v442, %v650
    %v653 = vtanh.pop %v652
    %v654 = vsub.f32 1.0, %v641
    %656 = vrot.lane.b32.xlu0 %v653, 96
    %v657 = vpop.permute.xlu0 %656
    %v659 = vmul.f32 %v654, %v657
    %v660 = vmul.f32 %v641, %v596
    %v661 = vadd.f32 %v659, %v660
    %663 = vrot.lane.b32.xlu0 %v661, 96
    %v664 = vpop.permute.xlu0 %663
    %v665 = vsel %vm463, %v664, 0
    %667 = vmatpush.msra.mxu0 0.0
    %668 = vmatpush.msra.mxu0 0.0
    %669 = vmatpush.msra.mxu0 0.0
    %670 = vmatpush.msra.mxu0 0.0
    %671 = vmatpush.msra.mxu0 0.0
    %672 = vmatpush.msra.mxu0 0.0
    %673 = vmatpush.msra.mxu0 0.0
    %674 = vmatpush.msra.mxu0 0.0
    %675 = vmatpush.msra.mxu0 0.0
    %676 = vmatpush.msra.mxu0 0.0
    %677 = vmatpush.msra.mxu0 0.0
    %678 = vmatpush.msra.mxu0 0.0
    %679 = vmatpush.msra.mxu0 %v462
    %680 = vmatpush.msra.mxu0 %v461
    %681 = vmatpush.msra.mxu0 %v460
    %682 = vmatpush.msra.mxu0 %v459
    %683 = vmatmul.f32.gmra.mxu0 %v665
    %v684 = vpop.f32.mrf.mxu0
    %v685 = vadd.f32 0.0, %v684
    %686 = vdwg.mxu0
    %v687 = vadd.f32 %v445, %v685
    %v688 = vxor.u32 %v687, 2147483648
    %v689 = vmul.f32 %v688, 1.442695
    %v690 = vpow.pop %v689
    %v691 = vadd.f32 %v690, 1.0
    %v692 = vrcp.pop %v691
    %v693 = vmul.f32 %v691, %v692
    %v694 = vsub.f32 1.0, %v693
    %v695 = vmul.f32 %v692, %v694
    %v696 = vadd.f32 %v692, %v695
    %vm697 = vweird.f32 %v691
    %vm698 = vweird.f32 %v692
    %vm699 = vmor %vm697, %vm698
    %v700 = vsel %vm699, %v692, %v696
    %v701 = vand.u32 2147483647, %v691
    %vm702 = vcmp.eq.f32.partialorder %v701, 8.507059e+37
    %v703 = vand.u32 %v691, 2147483648
    %v704 = vor.u32 1.1754944e-38, %v703
    %v705 = vsel %vm702, %v704, %v700
    %v706 = vmul.f32 1.0, %v705
    %v707 = vadd.f32 %v685, %v510
    %709 = vrot.lane.b32.xlu0 %v707, 64
    %v710 = vpop.permute.xlu0 %709
    %v712 = vmul.f32 %v706, %v710
    %714 = vrot.lane.b32.xlu0 %v712, 64
    %v715 = vpop.permute.xlu0 %714
    %v717 = vadd.f32 %v445, %v715
    %v718 = vtanh.pop %v717
    %v719 = vsub.f32 1.0, %v706
    %721 = vrot.lane.b32.xlu0 %v718, 96
    %v722 = vpop.permute.xlu0 %721
    %v724 = vmul.f32 %v719, %v722
    %v725 = vmul.f32 %v706, %v661
    %v726 = vadd.f32 %v724, %v725
    %728 = vrot.lane.b32.xlu0 %v726, 96
    %v729 = vpop.permute.xlu0 %728
    %v730 = vsel %vm463, %v729, 0
    %732 = vmatpush.msra.mxu0 0.0
    %733 = vmatpush.msra.mxu0 0.0
    %734 = vmatpush.msra.mxu0 0.0
    %735 = vmatpush.msra.mxu0 0.0
    %736 = vmatpush.msra.mxu0 0.0
    %737 = vmatpush.msra.mxu0 0.0
    %738 = vmatpush.msra.mxu0 0.0
    %739 = vmatpush.msra.mxu0 0.0
    %740 = vmatpush.msra.mxu0 0.0
    %741 = vmatpush.msra.mxu0 0.0
    %742 = vmatpush.msra.mxu0 0.0
    %743 = vmatpush.msra.mxu0 0.0
    %744 = vmatpush.msra.mxu0 %v462
    %745 = vmatpush.msra.mxu0 %v461
    %746 = vmatpush.msra.mxu0 %v460
    %747 = vmatpush.msra.mxu0 %v459
    %748 = vmatmul.f32.gmra.mxu0 %v730
    %v749 = vpop.f32.mrf.mxu0
    %v750 = vadd.f32 0.0, %v749
    %751 = vdwg.mxu0
    %v752 = vadd.f32 %v448, %v750
    %v753 = vxor.u32 %v752, 2147483648
    %v754 = vmul.f32 %v753, 1.442695
    %v755 = vpow.pop %v754
    %v756 = vadd.f32 %v755, 1.0
    %v757 = vrcp.pop %v756
    %v758 = vmul.f32 %v756, %v757
    %v759 = vsub.f32 1.0, %v758
    %v760 = vmul.f32 %v757, %v759
    %v761 = vadd.f32 %v757, %v760
    %vm762 = vweird.f32 %v756
    %vm763 = vweird.f32 %v757
    %vm764 = vmor %vm762, %vm763
    %v765 = vsel %vm764, %v757, %v761
    %v766 = vand.u32 2147483647, %v756
    %vm767 = vcmp.eq.f32.partialorder %v766, 8.507059e+37
    %v768 = vand.u32 %v756, 2147483648
    %v769 = vor.u32 1.1754944e-38, %v768
    %v770 = vsel %vm767, %v769, %v765
    %v771 = vmul.f32 1.0, %v770
    %v772 = vadd.f32 %v750, %v510
    %774 = vrot.lane.b32.xlu0 %v772, 64
    %v775 = vpop.permute.xlu0 %774
    %v777 = vmul.f32 %v771, %v775
    %779 = vrot.lane.b32.xlu0 %v777, 64
    %v780 = vpop.permute.xlu0 %779
    %v782 = vadd.f32 %v448, %v780
    %v783 = vtanh.pop %v782
    %v784 = vsub.f32 1.0, %v771
    %786 = vrot.lane.b32.xlu0 %v783, 96
    %v787 = vpop.permute.xlu0 %786
    %v789 = vmul.f32 %v784, %v787
    %v790 = vmul.f32 %v771, %v726
    %v791 = vadd.f32 %v789, %v790
    %793 = vrot.lane.b32.xlu0 %v791, 96
    %v794 = vpop.permute.xlu0 %793
    %v795 = vsel %vm463, %v794, 0
    %797 = vmatpush.msra.mxu0 0.0
    %798 = vmatpush.msra.mxu0 0.0
    %799 = vmatpush.msra.mxu0 0.0
    %800 = vmatpush.msra.mxu0 0.0
    %801 = vmatpush.msra.mxu0 0.0
    %802 = vmatpush.msra.mxu0 0.0
    %803 = vmatpush.msra.mxu0 0.0
    %804 = vmatpush.msra.mxu0 0.0
    %805 = vmatpush.msra.mxu0 0.0
    %806 = vmatpush.msra.mxu0 0.0
    %807 = vmatpush.msra.mxu0 0.0
    %808 = vmatpush.msra.mxu0 0.0
    %809 = vmatpush.msra.mxu0 %v462
    %810 = vmatpush.msra.mxu0 %v461
    %811 = vmatpush.msra.mxu0 %v460
    %812 = vmatpush.msra.mxu0 %v459
    %813 = vmatmul.f32.gmra.mxu0 %v795
    %v814 = vpop.f32.mrf.mxu0
    %v815 = vadd.f32 0.0, %v814
    %816 = vdwg.mxu0
    %v817 = vadd.f32 %v451, %v815
    %v818 = vxor.u32 %v817, 2147483648
    %v819 = vmul.f32 %v818, 1.442695
    %v820 = vpow.pop %v819
    %v821 = vadd.f32 %v820, 1.0
    %v822 = vrcp.pop %v821
    %v823 = vmul.f32 %v821, %v822
    %v824 = vsub.f32 1.0, %v823
    %v825 = vmul.f32 %v822, %v824
    %v826 = vadd.f32 %v822, %v825
    %vm827 = vweird.f32 %v821
    %vm828 = vweird.f32 %v822
    %vm829 = vmor %vm827, %vm828
    %v830 = vsel %vm829, %v822, %v826
    %v831 = vand.u32 2147483647, %v821
    %vm832 = vcmp.eq.f32.partialorder %v831, 8.507059e+37
    %v833 = vand.u32 %v821, 2147483648
    %v834 = vor.u32 1.1754944e-38, %v833
    %v835 = vsel %vm832, %v834, %v830
    %v836 = vmul.f32 1.0, %v835
    %v837 = vadd.f32 %v815, %v510
    %839 = vrot.lane.b32.xlu0 %v837, 64
    %v840 = vpop.permute.xlu0 %839
    %v842 = vmul.f32 %v836, %v840
    %844 = vrot.lane.b32.xlu0 %v842, 64
    %v845 = vpop.permute.xlu0 %844
    %v847 = vadd.f32 %v451, %v845
    %v848 = vtanh.pop %v847
    %v849 = vsub.f32 1.0, %v836
    %851 = vrot.lane.b32.xlu0 %v848, 96
    %v852 = vpop.permute.xlu0 %851
    %v854 = vmul.f32 %v849, %v852
    %v855 = vmul.f32 %v836, %v791
    %v856 = vadd.f32 %v854, %v855
    %858 = vrot.lane.b32.xlu0 %v856, 96
    %v859 = vpop.permute.xlu0 %858
    %v860 = vsel %vm463, %v859, 0
    %862 = vmatpush.msra.mxu0 0.0
    %863 = vmatpush.msra.mxu0 0.0
    %864 = vmatpush.msra.mxu0 0.0
    %865 = vmatpush.msra.mxu0 0.0
    %866 = vmatpush.msra.mxu0 0.0
    %867 = vmatpush.msra.mxu0 0.0
    %868 = vmatpush.msra.mxu0 0.0
    %869 = vmatpush.msra.mxu0 0.0
    %870 = vmatpush.msra.mxu0 0.0
    %871 = vmatpush.msra.mxu0 0.0
    %872 = vmatpush.msra.mxu0 0.0
    %873 = vmatpush.msra.mxu0 0.0
    %874 = vmatpush.msra.mxu0 %v462
    %875 = vmatpush.msra.mxu0 %v461
    %876 = vmatpush.msra.mxu0 %v460
    %877 = vmatpush.msra.mxu0 %v459
    %878 = vmatmul.f32.gmra.mxu0 %v860
    %v879 = vpop.f32.mrf.mxu0
    %v880 = vadd.f32 0.0, %v879
    %881 = vdwg.mxu0
    %v882 = vadd.f32 %v454, %v880
    %v883 = vxor.u32 %v882, 2147483648
    %v884 = vmul.f32 %v883, 1.442695
    %v885 = vpow.pop %v884
    %v886 = vadd.f32 %v885, 1.0
    %v887 = vrcp.pop %v886
    %v888 = vmul.f32 %v886, %v887
    %v889 = vsub.f32 1.0, %v888
    %v890 = vmul.f32 %v887, %v889
    %v891 = vadd.f32 %v887, %v890
    %vm892 = vweird.f32 %v886
    %vm893 = vweird.f32 %v887
    %vm894 = vmor %vm892, %vm893
    %v895 = vsel %vm894, %v887, %v891
    %v896 = vand.u32 2147483647, %v886
    %vm897 = vcmp.eq.f32.partialorder %v896, 8.507059e+37
    %v898 = vand.u32 %v886, 2147483648
    %v899 = vor.u32 1.1754944e-38, %v898
    %v900 = vsel %vm897, %v899, %v895
    %v901 = vmul.f32 1.0, %v900
    %v902 = vadd.f32 %v880, %v510
    %904 = vrot.lane.b32.xlu0 %v902, 64
    %v905 = vpop.permute.xlu0 %904
    %v907 = vmul.f32 %v901, %v905
    %909 = vrot.lane.b32.xlu0 %v907, 64
    %v910 = vpop.permute.xlu0 %909
    %v912 = vadd.f32 %v454, %v910
    %v913 = vtanh.pop %v912
    %v914 = vsub.f32 1.0, %v901
    %916 = vrot.lane.b32.xlu0 %v913, 96
    %v917 = vpop.permute.xlu0 %916
    %v919 = vmul.f32 %v914, %v917
    %v920 = vmul.f32 %v901, %v856
    %v921 = vadd.f32 %v919, %v920
    %923 = vrot.lane.b32.xlu0 %v921, 96
    %v924 = vpop.permute.xlu0 %923
    %v925 = vsel %vm463, %v924, 0
    %927 = vmatpush.msra.mxu0 0.0
    %928 = vmatpush.msra.mxu0 0.0
    %929 = vmatpush.msra.mxu0 0.0
    %930 = vmatpush.msra.mxu0 0.0
    %931 = vmatpush.msra.mxu0 0.0
    %932 = vmatpush.msra.mxu0 0.0
    %933 = vmatpush.msra.mxu0 0.0
    %934 = vmatpush.msra.mxu0 0.0
    %935 = vmatpush.msra.mxu0 0.0
    %936 = vmatpush.msra.mxu0 0.0
    %937 = vmatpush.msra.mxu0 0.0
    %938 = vmatpush.msra.mxu0 0.0
    %939 = vmatpush.msra.mxu0 %v462
    %940 = vmatpush.msra.mxu0 %v461
    %941 = vmatpush.msra.mxu0 %v460
    %942 = vmatpush.msra.mxu0 %v459
    %943 = vmatmul.f32.gmra.mxu0 %v925
    %v944 = vpop.f32.mrf.mxu0
    %v945 = vadd.f32 0.0, %v944
    %946 = vdwg.mxu0
    %v947 = vadd.f32 %v457, %v945
    %v948 = vxor.u32 %v947, 2147483648
    %v949 = vmul.f32 %v948, 1.442695
    %v950 = vpow.pop %v949
    %v951 = vadd.f32 %v950, 1.0
    %v952 = vrcp.pop %v951
    %v953 = vmul.f32 %v951, %v952
    %v954 = vsub.f32 1.0, %v953
    %v955 = vmul.f32 %v952, %v954
    %v956 = vadd.f32 %v952, %v955
    %vm957 = vweird.f32 %v951
    %vm958 = vweird.f32 %v952
    %vm959 = vmor %vm957, %vm958
    %v960 = vsel %vm959, %v952, %v956
    %v961 = vand.u32 2147483647, %v951
    %vm962 = vcmp.eq.f32.partialorder %v961, 8.507059e+37
    %v963 = vand.u32 %v951, 2147483648
    %v964 = vor.u32 1.1754944e-38, %v963
    %v965 = vsel %vm962, %v964, %v960
    %v966 = vmul.f32 1.0, %v965
    %v967 = vadd.f32 %v945, %v510
    %969 = vrot.lane.b32.xlu0 %v967, 64
    %v970 = vpop.permute.xlu0 %969
    %v972 = vmul.f32 %v966, %v970
    %974 = vrot.lane.b32.xlu0 %v972, 64
    %v975 = vpop.permute.xlu0 %974
    %v977 = vadd.f32 %v457, %v975
    %v978 = vtanh.pop %v977
    %v979 = vsub.f32 1.0, %v966
    %981 = vrot.lane.b32.xlu0 %v978, 96
    %v982 = vpop.permute.xlu0 %981
    %v984 = vmul.f32 %v979, %v982
    %v985 = vmul.f32 %v966, %v921
    %v986 = vadd.f32 %v984, %v985
    %v987 = vld [vmem:[%s1] sm:$0xff]
    %v988 = vld [vmem:[%s1 + $0x8] sm:$0xff]
    %v989 = vld [vmem:[%s1 + $0x10] sm:$0xff]
    %v990 = vld [vmem:[%s1 + $0x18] sm:$0xff]
    %v991 = vld [vmem:[%s1 + $0x20] sm:$0xff]
    %v992 = vld [vmem:[%s1 + $0x28] sm:$0xff]
    %v993 = vld [vmem:[%s1 + $0x30] sm:$0xff]
    %v994 = vld [vmem:[%s1 + $0x38] sm:$0xff]
    %v995 = vmul.f32 %v987, %v987
    %v996 = vmul.f32 %v988, %v988
    %v997 = vmul.f32 %v989, %v989
    %v998 = vmul.f32 %v990, %v990
    %v999 = vmul.f32 %v991, %v991
    %v1000 = vmul.f32 %v992, %v992
    %v1001 = vmul.f32 %v993, %v993
    %v1002 = vmul.f32 %v994, %v994
    %v1003 = vsel %vm463, %v995, 0.0
    %v1004 = vrot.slane %v1003, 4
    %v1005 = vadd.f32 %v1003, %v1004
    %v1006 = vrot.slane %v1005, 2
    %v1007 = vadd.f32 %v1005, %v1006
    %v1008 = vrot.slane %v1007, 1
    %v1009 = vadd.f32 %v1007, %v1008
    %v1010 = vsel %vm463, %v996, 0.0
    %v1011 = vrot.slane %v1010, 4
    %v1012 = vadd.f32 %v1010, %v1011
    %v1013 = vrot.slane %v1012, 2
    %v1014 = vadd.f32 %v1012, %v1013
    %v1015 = vrot.slane %v1014, 1
    %v1016 = vadd.f32 %v1014, %v1015
    %v1017 = vsel %vm463, %v997, 0.0
    %v1018 = vrot.slane %v1017, 4
    %v1019 = vadd.f32 %v1017, %v1018
    %v1020 = vrot.slane %v1019, 2
    %v1021 = vadd.f32 %v1019, %v1020
    %v1022 = vrot.slane %v1021, 1
    %v1023 = vadd.f32 %v1021, %v1022
    %v1024 = vsel %vm463, %v998, 0.0
    %v1025 = vrot.slane %v1024, 4
    %v1026 = vadd.f32 %v1024, %v1025
    %v1027 = vrot.slane %v1026, 2
    %v1028 = vadd.f32 %v1026, %v1027
    %v1029 = vrot.slane %v1028, 1
    %v1030 = vadd.f32 %v1028, %v1029
    %v1031 = vsel %vm463, %v999, 0.0
    %v1032 = vrot.slane %v1031, 4
    %v1033 = vadd.f32 %v1031, %v1032
    %v1034 = vrot.slane %v1033, 2
    %v1035 = vadd.f32 %v1033, %v1034
    %v1036 = vrot.slane %v1035, 1
    %v1037 = vadd.f32 %v1035, %v1036
    %v1038 = vsel %vm463, %v1000, 0.0
    %v1039 = vrot.slane %v1038, 4
    %v1040 = vadd.f32 %v1038, %v1039
    %v1041 = vrot.slane %v1040, 2
    %v1042 = vadd.f32 %v1040, %v1041
    %v1043 = vrot.slane %v1042, 1
    %v1044 = vadd.f32 %v1042, %v1043
    %v1045 = vsel %vm463, %v1001, 0.0
    %v1046 = vrot.slane %v1045, 4
    %v1047 = vadd.f32 %v1045, %v1046
    %v1048 = vrot.slane %v1047, 2
    %v1049 = vadd.f32 %v1047, %v1048
    %v1050 = vrot.slane %v1049, 1
    %v1051 = vadd.f32 %v1049, %v1050
    %v1052 = vsel %vm463, %v1002, 0.0
    %v1053 = vrot.slane %v1052, 4
    %v1054 = vadd.f32 %v1052, %v1053
    %v1055 = vrot.slane %v1054, 2
    %v1056 = vadd.f32 %v1054, %v1055
    %v1057 = vrot.slane %v1056, 1
    %v1058 = vadd.f32 %v1056, %v1057
    %v1059 = vmax.f32 %v1009, 1e-24
    %v1060 = vmax.f32 %v1016, 1e-24
    %v1061 = vmax.f32 %v1023, 1e-24
    %v1062 = vmax.f32 %v1030, 1e-24
    %v1063 = vmax.f32 %v1037, 1e-24
    %v1064 = vmax.f32 %v1044, 1e-24
    %v1065 = vmax.f32 %v1051, 1e-24
    %v1066 = vmax.f32 %v1058, 1e-24
    %v1067 = vrsqrt.pop %v1059
    %v1068 = vmul.f32 %v1067, %v1059
    %v1069 = vmul.f32 %v1068, %v1067
    %v1070 = vmul.f32 0.5, %v1069
    %v1071 = vsub.f32 1.5, %v1070
    %v1072 = vmul.f32 %v1067, %v1071
    %vm1073 = vweird.f32 %v1059
    %vm1074 = vweird.f32 %v1067
    %vm1075 = vmor %vm1073, %vm1074
    %v1076 = vsel %vm1075, %v1067, %v1072
    %v1077 = vrsqrt.pop %v1060
    %v1078 = vmul.f32 %v1077, %v1060
    %v1079 = vmul.f32 %v1078, %v1077
    %v1080 = vmul.f32 0.5, %v1079
    %v1081 = vsub.f32 1.5, %v1080
    %v1082 = vmul.f32 %v1077, %v1081
    %vm1083 = vweird.f32 %v1060
    %vm1084 = vweird.f32 %v1077
    %vm1085 = vmor %vm1083, %vm1084
    %v1086 = vsel %vm1085, %v1077, %v1082
    %v1087 = vrsqrt.pop %v1061
    %v1088 = vmul.f32 %v1087, %v1061
    %v1089 = vmul.f32 %v1088, %v1087
    %v1090 = vmul.f32 0.5, %v1089
    %v1091 = vsub.f32 1.5, %v1090
    %v1092 = vmul.f32 %v1087, %v1091
    %vm1093 = vweird.f32 %v1061
    %vm1094 = vweird.f32 %v1087
    %vm1095 = vmor %vm1093, %vm1094
    %v1096 = vsel %vm1095, %v1087, %v1092
    %v1097 = vrsqrt.pop %v1062
    %v1098 = vmul.f32 %v1097, %v1062
    %v1099 = vmul.f32 %v1098, %v1097
    %v1100 = vmul.f32 0.5, %v1099
    %v1101 = vsub.f32 1.5, %v1100
    %v1102 = vmul.f32 %v1097, %v1101
    %vm1103 = vweird.f32 %v1062
    %vm1104 = vweird.f32 %v1097
    %vm1105 = vmor %vm1103, %vm1104
    %v1106 = vsel %vm1105, %v1097, %v1102
    %v1107 = vrsqrt.pop %v1063
    %v1108 = vmul.f32 %v1107, %v1063
    %v1109 = vmul.f32 %v1108, %v1107
    %v1110 = vmul.f32 0.5, %v1109
    %v1111 = vsub.f32 1.5, %v1110
    %v1112 = vmul.f32 %v1107, %v1111
    %vm1113 = vweird.f32 %v1063
    %vm1114 = vweird.f32 %v1107
    %vm1115 = vmor %vm1113, %vm1114
    %v1116 = vsel %vm1115, %v1107, %v1112
    %v1117 = vrsqrt.pop %v1064
    %v1118 = vmul.f32 %v1117, %v1064
    %v1119 = vmul.f32 %v1118, %v1117
    %v1120 = vmul.f32 0.5, %v1119
    %v1121 = vsub.f32 1.5, %v1120
    %v1122 = vmul.f32 %v1117, %v1121
    %vm1123 = vweird.f32 %v1064
    %vm1124 = vweird.f32 %v1117
    %vm1125 = vmor %vm1123, %vm1124
    %v1126 = vsel %vm1125, %v1117, %v1122
    %v1127 = vrsqrt.pop %v1065
    %v1128 = vmul.f32 %v1127, %v1065
    %v1129 = vmul.f32 %v1128, %v1127
    %v1130 = vmul.f32 0.5, %v1129
    %v1131 = vsub.f32 1.5, %v1130
    %v1132 = vmul.f32 %v1127, %v1131
    %vm1133 = vweird.f32 %v1065
    %vm1134 = vweird.f32 %v1127
    %vm1135 = vmor %vm1133, %vm1134
    %v1136 = vsel %vm1135, %v1127, %v1132
    %v1137 = vrsqrt.pop %v1066
    %v1138 = vmul.f32 %v1137, %v1066
    %v1139 = vmul.f32 %v1138, %v1137
    %v1140 = vmul.f32 0.5, %v1139
    %v1141 = vsub.f32 1.5, %v1140
    %v1142 = vmul.f32 %v1137, %v1141
    %vm1143 = vweird.f32 %v1066
    %vm1144 = vweird.f32 %v1137
    %vm1145 = vmor %vm1143, %vm1144
    %v1146 = vsel %vm1145, %v1137, %v1142
    %v1147 = vmul.f32 %v987, %v1076
    %v1148 = vmul.f32 %v988, %v1086
    %v1149 = vmul.f32 %v989, %v1096
    %v1150 = vmul.f32 %v990, %v1106
    %v1151 = vmul.f32 %v991, %v1116
    %v1152 = vmul.f32 %v992, %v1126
    %v1153 = vmul.f32 %v993, %v1136
    %v1154 = vmul.f32 %v994, %v1146
    %v1155 = vld [vmem:[%s4 + $0x40] sm:$0xff]
    %v1156 = vld [vmem:[%s4 + $0x48] sm:$0xff]
    %v1157 = vld [vmem:[%s4 + $0x50] sm:$0xff]
    %v1158 = vld [vmem:[%s4 + $0x58] sm:$0xff]
    %v1159 = vld [vmem:[%s4 + $0x20] sm:$0xff]
    %v1160 = vld [vmem:[%s4 + $0x28] sm:$0xff]
    %v1161 = vld [vmem:[%s4 + $0x30] sm:$0xff]
    %v1162 = vld [vmem:[%s4 + $0x38] sm:$0xff]
    %v1164 = vsel %vm463, %v1147, 0
    %v1167 = vsel %vm463, %v1148, 0
    %v1170 = vsel %vm463, %v1149, 0
    %v1173 = vsel %vm463, %v1150, 0
    %v1176 = vsel %vm463, %v1151, 0
    %v1179 = vsel %vm463, %v1152, 0
    %v1182 = vsel %vm463, %v1153, 0
    %v1185 = vsel %vm463, %v1154, 0
    %1187 = vmatpush.msra.mxu0 0.0
    %1188 = vmatpush.msra.mxu0 0.0
    %1189 = vmatpush.msra.mxu0 0.0
    %1190 = vmatpush.msra.mxu0 0.0
    %1191 = vmatpush.msra.mxu0 0.0
    %1192 = vmatpush.msra.mxu0 0.0
    %1193 = vmatpush.msra.mxu0 0.0
    %1194 = vmatpush.msra.mxu0 0.0
    %1195 = vmatpush.msra.mxu0 0.0
    %1196 = vmatpush.msra.mxu0 0.0
    %1197 = vmatpush.msra.mxu0 0.0
    %1198 = vmatpush.msra.mxu0 0.0
    %1199 = vmatpush.msra.mxu0 %v1158
    %1200 = vmatpush.msra.mxu0 %v1157
    %1201 = vmatpush.msra.mxu0 %v1156
    %1202 = vmatpush.msra.mxu0 %v1155
    %1203 = vmatmul.f32.gmra.mxu0 %v1164
    %v1204 = vpop.f32.mrf.mxu0
    %v1205 = vadd.f32 0.0, %v1204
    %1206 = vmatmul.f32.gmra.mxu0 %v1167
    %v1207 = vpop.f32.mrf.mxu0
    %v1208 = vadd.f32 0.0, %v1207
    %1209 = vmatmul.f32.gmra.mxu0 %v1170
    %v1210 = vpop.f32.mrf.mxu0
    %v1211 = vadd.f32 0.0, %v1210
    %1212 = vmatmul.f32.gmra.mxu0 %v1173
    %v1213 = vpop.f32.mrf.mxu0
    %v1214 = vadd.f32 0.0, %v1213
    %1215 = vmatmul.f32.gmra.mxu0 %v1176
    %v1216 = vpop.f32.mrf.mxu0
    %v1217 = vadd.f32 0.0, %v1216
    %1218 = vmatmul.f32.gmra.mxu0 %v1179
    %v1219 = vpop.f32.mrf.mxu0
    %v1220 = vadd.f32 0.0, %v1219
    %1221 = vmatmul.f32.gmra.mxu0 %v1182
    %v1222 = vpop.f32.mrf.mxu0
    %v1223 = vadd.f32 0.0, %v1222
    %1224 = vmatmul.f32.gmra.mxu0 %v1185
    %v1225 = vpop.f32.mrf.mxu0
    %v1226 = vadd.f32 0.0, %v1225
    %1227 = vdwg.mxu0
    %v1228 = vperm.slane %v26, 0
    %1230 = vrot.lane.b32.xlu0 %v986, 96
    %v1231 = vpop.permute.xlu0 %1230
    %v1232 = vsel %vm463, %v1231, 0
    %1234 = vmatpush.msra.mxu0 0.0
    %1235 = vmatpush.msra.mxu0 0.0
    %1236 = vmatpush.msra.mxu0 0.0
    %1237 = vmatpush.msra.mxu0 0.0
    %1238 = vmatpush.msra.mxu0 0.0
    %1239 = vmatpush.msra.mxu0 0.0
    %1240 = vmatpush.msra.mxu0 0.0
    %1241 = vmatpush.msra.mxu0 0.0
    %1242 = vmatpush.msra.mxu0 0.0
    %1243 = vmatpush.msra.mxu0 0.0
    %1244 = vmatpush.msra.mxu0 0.0
    %1245 = vmatpush.msra.mxu0 0.0
    %1246 = vmatpush.msra.mxu0 %v1162
    %1247 = vmatpush.msra.mxu0 %v1161
    %1248 = vmatpush.msra.mxu0 %v1160
    %1249 = vmatpush.msra.mxu0 %v1159
    %1250 = vmatmul.f32.gmra.mxu0 %v1232
    %v1251 = vpop.f32.mrf.mxu0
    %v1252 = vadd.f32 %v1228, %v1251
    %1253 = vdwg.mxu0
    %v1255 = vrot.slane %v1252, 1
    %v1256 = vrot.slane %v1252, 2
    %v1257 = vrot.slane %v1252, 3
    %v1258 = vrot.slane %v1252, 4
    %v1259 = vrot.slane %v1252, 5
    %v1260 = vrot.slane %v1252, 6
    %v1261 = vrot.slane %v1252, 7
    %v1262 = vperm.slane %v1252, 0
    %v1263 = vperm.slane %v1255, 0
    %v1264 = vperm.slane %v1256, 0
    %v1265 = vperm.slane %v1257, 0
    %v1266 = vperm.slane %v1258, 0
    %v1267 = vperm.slane %v1259, 0
    %v1268 = vperm.slane %v1260, 0
    %v1269 = vperm.slane %v1261, 0
    %v1278 = vadd.f32 %v1205, %v1262
    %v1279 = vadd.f32 %v1208, %v1263
    %v1280 = vadd.f32 %v1211, %v1264
    %v1281 = vadd.f32 %v1214, %v1265
    %v1282 = vadd.f32 %v1217, %v1266
    %v1283 = vadd.f32 %v1220, %v1267
    %v1284 = vadd.f32 %v1223, %v1268
    %v1285 = vadd.f32 %v1226, %v1269
    %v1286 = vtanh.pop %v1278
    %v1287 = vtanh.pop %v1279
    %v1288 = vtanh.pop %v1280
    %v1289 = vtanh.pop %v1281
    %v1290 = vtanh.pop %v1282
    %v1291 = vtanh.pop %v1283
    %v1292 = vtanh.pop %v1284
    %v1293 = vtanh.pop %v1285
    %v1294 = vxor.u32 %v1278, 2147483648
    %v1295 = vxor.u32 %v1279, 2147483648
    %v1296 = vxor.u32 %v1280, 2147483648
    %v1297 = vxor.u32 %v1281, 2147483648
    %v1298 = vxor.u32 %v1282, 2147483648
    %v1299 = vxor.u32 %v1283, 2147483648
    %v1300 = vxor.u32 %v1284, 2147483648
    %v1301 = vxor.u32 %v1285, 2147483648
    %v1302 = vmul.f32 %v1294, 1.442695
    %v1303 = vpow.pop %v1302
    %v1304 = vmul.f32 %v1295, 1.442695
    %v1305 = vpow.pop %v1304
    %v1306 = vmul.f32 %v1296, 1.442695
    %v1307 = vpow.pop %v1306
    %v1308 = vmul.f32 %v1297, 1.442695
    %v1309 = vpow.pop %v1308
    %v1310 = vmul.f32 %v1298, 1.442695
    %v1311 = vpow.pop %v1310
    %v1312 = vmul.f32 %v1299, 1.442695
    %v1313 = vpow.pop %v1312
    %v1314 = vmul.f32 %v1300, 1.442695
    %v1315 = vpow.pop %v1314
    %v1316 = vmul.f32 %v1301, 1.442695
    %v1317 = vpow.pop %v1316
    %v1318 = vadd.f32 %v1303, 1.0
    %v1319 = vadd.f32 %v1305, 1.0
    %v1320 = vadd.f32 %v1307, 1.0
    %v1321 = vadd.f32 %v1309, 1.0
    %v1322 = vadd.f32 %v1311, 1.0
    %v1323 = vadd.f32 %v1313, 1.0
    %v1324 = vadd.f32 %v1315, 1.0
    %v1325 = vadd.f32 %v1317, 1.0
    %v1326 = vrcp.pop %v1318
    %v1327 = vmul.f32 %v1318, %v1326
    %v1328 = vsub.f32 1.0, %v1327
    %v1329 = vmul.f32 %v1326, %v1328
    %v1330 = vadd.f32 %v1326, %v1329
    %vm1331 = vweird.f32 %v1318
    %vm1332 = vweird.f32 %v1326
    %vm1333 = vmor %vm1331, %vm1332
    %v1334 = vsel %vm1333, %v1326, %v1330
    %v1335 = vand.u32 2147483647, %v1318
    %vm1336 = vcmp.eq.f32.partialorder %v1335, 8.507059e+37
    %v1337 = vand.u32 %v1318, 2147483648
    %v1338 = vor.u32 1.1754944e-38, %v1337
    %v1339 = vsel %vm1336, %v1338, %v1334
    %v1340 = vmul.f32 1.0, %v1339
    %v1341 = vrcp.pop %v1319
    %v1342 = vmul.f32 %v1319, %v1341
    %v1343 = vsub.f32 1.0, %v1342
    %v1344 = vmul.f32 %v1341, %v1343
    %v1345 = vadd.f32 %v1341, %v1344
    %vm1346 = vweird.f32 %v1319
    %vm1347 = vweird.f32 %v1341
    %vm1348 = vmor %vm1346, %vm1347
    %v1349 = vsel %vm1348, %v1341, %v1345
    %v1350 = vand.u32 2147483647, %v1319
    %vm1351 = vcmp.eq.f32.partialorder %v1350, 8.507059e+37
    %v1352 = vand.u32 %v1319, 2147483648
    %v1353 = vor.u32 1.1754944e-38, %v1352
    %v1354 = vsel %vm1351, %v1353, %v1349
    %v1355 = vmul.f32 1.0, %v1354
    %v1356 = vrcp.pop %v1320
    %v1357 = vmul.f32 %v1320, %v1356
    %v1358 = vsub.f32 1.0, %v1357
    %v1359 = vmul.f32 %v1356, %v1358
    %v1360 = vadd.f32 %v1356, %v1359
    %vm1361 = vweird.f32 %v1320
    %vm1362 = vweird.f32 %v1356
    %vm1363 = vmor %vm1361, %vm1362
    %v1364 = vsel %vm1363, %v1356, %v1360
    %v1365 = vand.u32 2147483647, %v1320
    %vm1366 = vcmp.eq.f32.partialorder %v1365, 8.507059e+37
    %v1367 = vand.u32 %v1320, 2147483648
    %v1368 = vor.u32 1.1754944e-38, %v1367
    %v1369 = vsel %vm1366, %v1368, %v1364
    %v1370 = vmul.f32 1.0, %v1369
    %v1371 = vrcp.pop %v1321
    %v1372 = vmul.f32 %v1321, %v1371
    %v1373 = vsub.f32 1.0, %v1372
    %v1374 = vmul.f32 %v1371, %v1373
    %v1375 = vadd.f32 %v1371, %v1374
    %vm1376 = vweird.f32 %v1321
    %vm1377 = vweird.f32 %v1371
    %vm1378 = vmor %vm1376, %vm1377
    %v1379 = vsel %vm1378, %v1371, %v1375
    %v1380 = vand.u32 2147483647, %v1321
    %vm1381 = vcmp.eq.f32.partialorder %v1380, 8.507059e+37
    %v1382 = vand.u32 %v1321, 2147483648
    %v1383 = vor.u32 1.1754944e-38, %v1382
    %v1384 = vsel %vm1381, %v1383, %v1379
    %v1385 = vmul.f32 1.0, %v1384
    %v1386 = vrcp.pop %v1322
    %v1387 = vmul.f32 %v1322, %v1386
    %v1388 = vsub.f32 1.0, %v1387
    %v1389 = vmul.f32 %v1386, %v1388
    %v1390 = vadd.f32 %v1386, %v1389
    %vm1391 = vweird.f32 %v1322
    %vm1392 = vweird.f32 %v1386
    %vm1393 = vmor %vm1391, %vm1392
    %v1394 = vsel %vm1393, %v1386, %v1390
    %v1395 = vand.u32 2147483647, %v1322
    %vm1396 = vcmp.eq.f32.partialorder %v1395, 8.507059e+37
    %v1397 = vand.u32 %v1322, 2147483648
    %v1398 = vor.u32 1.1754944e-38, %v1397
    %v1399 = vsel %vm1396, %v1398, %v1394
    %v1400 = vmul.f32 1.0, %v1399
    %v1401 = vrcp.pop %v1323
    %v1402 = vmul.f32 %v1323, %v1401
    %v1403 = vsub.f32 1.0, %v1402
    %v1404 = vmul.f32 %v1401, %v1403
    %v1405 = vadd.f32 %v1401, %v1404
    %vm1406 = vweird.f32 %v1323
    %vm1407 = vweird.f32 %v1401
    %vm1408 = vmor %vm1406, %vm1407
    %v1409 = vsel %vm1408, %v1401, %v1405
    %v1410 = vand.u32 2147483647, %v1323
    %vm1411 = vcmp.eq.f32.partialorder %v1410, 8.507059e+37
    %v1412 = vand.u32 %v1323, 2147483648
    %v1413 = vor.u32 1.1754944e-38, %v1412
    %v1414 = vsel %vm1411, %v1413, %v1409
    %v1415 = vmul.f32 1.0, %v1414
    %v1416 = vrcp.pop %v1324
    %v1417 = vmul.f32 %v1324, %v1416
    %v1418 = vsub.f32 1.0, %v1417
    %v1419 = vmul.f32 %v1416, %v1418
    %v1420 = vadd.f32 %v1416, %v1419
    %vm1421 = vweird.f32 %v1324
    %vm1422 = vweird.f32 %v1416
    %vm1423 = vmor %vm1421, %vm1422
    %v1424 = vsel %vm1423, %v1416, %v1420
    %v1425 = vand.u32 2147483647, %v1324
    %vm1426 = vcmp.eq.f32.partialorder %v1425, 8.507059e+37
    %v1427 = vand.u32 %v1324, 2147483648
    %v1428 = vor.u32 1.1754944e-38, %v1427
    %v1429 = vsel %vm1426, %v1428, %v1424
    %v1430 = vmul.f32 1.0, %v1429
    %v1431 = vrcp.pop %v1325
    %v1432 = vmul.f32 %v1325, %v1431
    %v1433 = vsub.f32 1.0, %v1432
    %v1434 = vmul.f32 %v1431, %v1433
    %v1435 = vadd.f32 %v1431, %v1434
    %vm1436 = vweird.f32 %v1325
    %vm1437 = vweird.f32 %v1431
    %vm1438 = vmor %vm1436, %vm1437
    %v1439 = vsel %vm1438, %v1431, %v1435
    %v1440 = vand.u32 2147483647, %v1325
    %vm1441 = vcmp.eq.f32.partialorder %v1440, 8.507059e+37
    %v1442 = vand.u32 %v1325, 2147483648
    %v1443 = vor.u32 1.1754944e-38, %v1442
    %v1444 = vsel %vm1441, %v1443, %v1439
    %v1445 = vmul.f32 1.0, %v1444
    %1454 = vrot.lane.b32.xlu0 %v1340, 96
    %v1455 = vpop.permute.xlu0 %1454
    %1456 = vrot.lane.b32.xlu0 %v1355, 96
    %v1457 = vpop.permute.xlu0 %1456
    %1458 = vrot.lane.b32.xlu0 %v1370, 96
    %v1459 = vpop.permute.xlu0 %1458
    %1460 = vrot.lane.b32.xlu0 %v1385, 96
    %v1461 = vpop.permute.xlu0 %1460
    %1462 = vrot.lane.b32.xlu0 %v1400, 96
    %v1463 = vpop.permute.xlu0 %1462
    %1464 = vrot.lane.b32.xlu0 %v1415, 96
    %v1465 = vpop.permute.xlu0 %1464
    %1466 = vrot.lane.b32.xlu0 %v1430, 96
    %v1467 = vpop.permute.xlu0 %1466
    %1468 = vrot.lane.b32.xlu0 %v1445, 96
    %v1469 = vpop.permute.xlu0 %1468
    %v1478 = vmul.f32 %v1286, %v1455
    %v1479 = vmul.f32 %v1287, %v1457
    %v1480 = vmul.f32 %v1288, %v1459
    %v1481 = vmul.f32 %v1289, %v1461
    %v1482 = vmul.f32 %v1290, %v1463
    %v1483 = vmul.f32 %v1291, %v1465
    %v1484 = vmul.f32 %v1292, %v1467
    %v1485 = vmul.f32 %v1293, %v1469
    %v1486 = vperm.slane %v27, 0
    %v1487 = vmul.f32 %v1478, %v1486
    %v1488 = vmul.f32 %v1479, %v1486
    %v1489 = vmul.f32 %v1480, %v1486
    %v1490 = vmul.f32 %v1481, %v1486
    %v1491 = vmul.f32 %v1482, %v1486
    %v1492 = vmul.f32 %v1483, %v1486
    %v1493 = vmul.f32 %v1484, %v1486
    %v1494 = vmul.f32 %v1485, %v1486
    %v1495 = vsel %vm463, %v1487, 0.0
    %1496 = vadd.xlane.f32.xlu0 %v1495
    %v1497 = vpop.xlane.xlu0 %1496
    %v1498 = vsel %vm463, %v1488, 0.0
    %1499 = vadd.xlane.f32.xlu0 %v1498
    %v1500 = vpop.xlane.xlu0 %1499
    %v1501 = vsel %vm463, %v1489, 0.0
    %1502 = vadd.xlane.f32.xlu0 %v1501
    %v1503 = vpop.xlane.xlu0 %1502
    %v1504 = vsel %vm463, %v1490, 0.0
    %1505 = vadd.xlane.f32.xlu0 %v1504
    %v1506 = vpop.xlane.xlu0 %1505
    %v1507 = vsel %vm463, %v1491, 0.0
    %1508 = vadd.xlane.f32.xlu0 %v1507
    %v1509 = vpop.xlane.xlu0 %1508
    %v1510 = vsel %vm463, %v1492, 0.0
    %1511 = vadd.xlane.f32.xlu0 %v1510
    %v1512 = vpop.xlane.xlu0 %1511
    %v1513 = vsel %vm463, %v1493, 0.0
    %1514 = vadd.xlane.f32.xlu0 %v1513
    %v1515 = vpop.xlane.xlu0 %1514
    %v1516 = vsel %vm463, %v1494, 0.0
    %1517 = vadd.xlane.f32.xlu0 %v1516
    %v1518 = vpop.xlane.xlu0 %1517
    %v1519 = vadd.f32 %v1497, %v1486
    %v1520 = vadd.f32 %v1500, %v1486
    %v1521 = vadd.f32 %v1503, %v1486
    %v1522 = vadd.f32 %v1506, %v1486
    %v1523 = vadd.f32 %v1509, %v1486
    %v1524 = vadd.f32 %v1512, %v1486
    %v1525 = vadd.f32 %v1515, %v1486
    %v1526 = vadd.f32 %v1518, %v1486
    %vm1527 = vcmask 269568
    %v1528 = vsel %vm1527, %v1519, -inf
    %v1529 = vrot.slane %v1528, 4
    %v1530 = vmax.f32 %v1528, %v1529
    %v1531 = vrot.slane %v1530, 2
    %v1532 = vmax.f32 %v1530, %v1531
    %v1533 = vrot.slane %v1532, 1
    %v1534 = vmax.f32 %v1532, %v1533
    %v1535 = vsel %vm1527, %v1520, -inf
    %v1536 = vrot.slane %v1535, 4
    %v1537 = vmax.f32 %v1535, %v1536
    %v1538 = vrot.slane %v1537, 2
    %v1539 = vmax.f32 %v1537, %v1538
    %v1540 = vrot.slane %v1539, 1
    %v1541 = vmax.f32 %v1539, %v1540
    %v1542 = vsel %vm1527, %v1521, -inf
    %v1543 = vrot.slane %v1542, 4
    %v1544 = vmax.f32 %v1542, %v1543
    %v1545 = vrot.slane %v1544, 2
    %v1546 = vmax.f32 %v1544, %v1545
    %v1547 = vrot.slane %v1546, 1
    %v1548 = vmax.f32 %v1546, %v1547
    %v1549 = vsel %vm1527, %v1522, -inf
    %v1550 = vrot.slane %v1549, 4
    %v1551 = vmax.f32 %v1549, %v1550
    %v1552 = vrot.slane %v1551, 2
    %v1553 = vmax.f32 %v1551, %v1552
    %v1554 = vrot.slane %v1553, 1
    %v1555 = vmax.f32 %v1553, %v1554
    %v1556 = vsel %vm1527, %v1523, -inf
    %v1557 = vrot.slane %v1556, 4
    %v1558 = vmax.f32 %v1556, %v1557
    %v1559 = vrot.slane %v1558, 2
    %v1560 = vmax.f32 %v1558, %v1559
    %v1561 = vrot.slane %v1560, 1
    %v1562 = vmax.f32 %v1560, %v1561
    %v1563 = vsel %vm1527, %v1524, -inf
    %v1564 = vrot.slane %v1563, 4
    %v1565 = vmax.f32 %v1563, %v1564
    %v1566 = vrot.slane %v1565, 2
    %v1567 = vmax.f32 %v1565, %v1566
    %v1568 = vrot.slane %v1567, 1
    %v1569 = vmax.f32 %v1567, %v1568
    %v1570 = vsel %vm1527, %v1525, -inf
    %v1571 = vrot.slane %v1570, 4
    %v1572 = vmax.f32 %v1570, %v1571
    %v1573 = vrot.slane %v1572, 2
    %v1574 = vmax.f32 %v1572, %v1573
    %v1575 = vrot.slane %v1574, 1
    %v1576 = vmax.f32 %v1574, %v1575
    %v1577 = vsel %vm1527, %v1526, -inf
    %v1578 = vrot.slane %v1577, 4
    %v1579 = vmax.f32 %v1577, %v1578
    %v1580 = vrot.slane %v1579, 2
    %v1581 = vmax.f32 %v1579, %v1580
    %v1582 = vrot.slane %v1581, 1
    %v1583 = vmax.f32 %v1581, %v1582
    %v1584 = vsub.f32 %v1519, %v1534
    %v1585 = vsub.f32 %v1520, %v1541
    %v1586 = vsub.f32 %v1521, %v1548
    %v1587 = vsub.f32 %v1522, %v1555
    %v1588 = vsub.f32 %v1523, %v1562
    %v1589 = vsub.f32 %v1524, %v1569
    %v1590 = vsub.f32 %v1525, %v1576
    %v1591 = vsub.f32 %v1526, %v1583
    %v1592 = vmul.f32 %v1584, 1.442695
    %v1593 = vpow.pop %v1592
    %v1594 = vmul.f32 %v1585, 1.442695
    %v1595 = vpow.pop %v1594
    %v1596 = vmul.f32 %v1586, 1.442695
    %v1597 = vpow.pop %v1596
    %v1598 = vmul.f32 %v1587, 1.442695
    %v1599 = vpow.pop %v1598
    %v1600 = vmul.f32 %v1588, 1.442695
    %v1601 = vpow.pop %v1600
    %v1602 = vmul.f32 %v1589, 1.442695
    %v1603 = vpow.pop %v1602
    %v1604 = vmul.f32 %v1590, 1.442695
    %v1605 = vpow.pop %v1604
    %v1606 = vmul.f32 %v1591, 1.442695
    %v1607 = vpow.pop %v1606
    %v1608 = vsel %vm1527, %v1593, 0.0
    %v1609 = vrot.slane %v1608, 4
    %v1610 = vadd.f32 %v1608, %v1609
    %v1611 = vrot.slane %v1610, 2
    %v1612 = vadd.f32 %v1610, %v1611
    %v1613 = vrot.slane %v1612, 1
    %v1614 = vadd.f32 %v1612, %v1613
    %v1615 = vsel %vm1527, %v1595, 0.0
    %v1616 = vrot.slane %v1615, 4
    %v1617 = vadd.f32 %v1615, %v1616
    %v1618 = vrot.slane %v1617, 2
    %v1619 = vadd.f32 %v1617, %v1618
    %v1620 = vrot.slane %v1619, 1
    %v1621 = vadd.f32 %v1619, %v1620
    %v1622 = vsel %vm1527, %v1597, 0.0
    %v1623 = vrot.slane %v1622, 4
    %v1624 = vadd.f32 %v1622, %v1623
    %v1625 = vrot.slane %v1624, 2
    %v1626 = vadd.f32 %v1624, %v1625
    %v1627 = vrot.slane %v1626, 1
    %v1628 = vadd.f32 %v1626, %v1627
    %v1629 = vsel %vm1527, %v1599, 0.0
    %v1630 = vrot.slane %v1629, 4
    %v1631 = vadd.f32 %v1629, %v1630
    %v1632 = vrot.slane %v1631, 2
    %v1633 = vadd.f32 %v1631, %v1632
    %v1634 = vrot.slane %v1633, 1
    %v1635 = vadd.f32 %v1633, %v1634
    %v1636 = vsel %vm1527, %v1601, 0.0
    %v1637 = vrot.slane %v1636, 4
    %v1638 = vadd.f32 %v1636, %v1637
    %v1639 = vrot.slane %v1638, 2
    %v1640 = vadd.f32 %v1638, %v1639
    %v1641 = vrot.slane %v1640, 1
    %v1642 = vadd.f32 %v1640, %v1641
    %v1643 = vsel %vm1527, %v1603, 0.0
    %v1644 = vrot.slane %v1643, 4
    %v1645 = vadd.f32 %v1643, %v1644
    %v1646 = vrot.slane %v1645, 2
    %v1647 = vadd.f32 %v1645, %v1646
    %v1648 = vrot.slane %v1647, 1
    %v1649 = vadd.f32 %v1647, %v1648
    %v1650 = vsel %vm1527, %v1605, 0.0
    %v1651 = vrot.slane %v1650, 4
    %v1652 = vadd.f32 %v1650, %v1651
    %v1653 = vrot.slane %v1652, 2
    %v1654 = vadd.f32 %v1652, %v1653
    %v1655 = vrot.slane %v1654, 1
    %v1656 = vadd.f32 %v1654, %v1655
    %v1657 = vsel %vm1527, %v1607, 0.0
    %v1658 = vrot.slane %v1657, 4
    %v1659 = vadd.f32 %v1657, %v1658
    %v1660 = vrot.slane %v1659, 2
    %v1661 = vadd.f32 %v1659, %v1660
    %v1662 = vrot.slane %v1661, 1
    %v1663 = vadd.f32 %v1661, %v1662
    %v1664 = vrcp.pop %v1614
    %v1665 = vrcp.pop %v1621
    %v1666 = vrcp.pop %v1628
    %v1667 = vrcp.pop %v1635
    %v1668 = vrcp.pop %v1642
    %v1669 = vrcp.pop %v1649
    %v1670 = vrcp.pop %v1656
    %v1671 = vrcp.pop %v1663
    %v1672 = vmul.f32 %v1593, %v1664
    %v1673 = vmul.f32 %v1595, %v1665
    %v1674 = vmul.f32 %v1597, %v1666
    %v1675 = vmul.f32 %v1599, %v1667
    %v1676 = vmul.f32 %v1601, %v1668
    %v1677 = vmul.f32 %v1603, %v1669
    %v1678 = vmul.f32 %v1605, %v1670
    %v1679 = vmul.f32 %v1607, %v1671
    %1681 = vset.pattern.permute.xlu0 32
    %1682 = vperm.xlu0 %1681, %v1672
    %v1683 = vpop.permute.xlu0 %1682
    %1686 = vset.pattern.permute.xlu0 32
    %1687 = vperm.xlu0 %1686, %v1673
    %v1688 = vpop.permute.xlu0 %1687
    %1691 = vset.pattern.permute.xlu0 32
    %1692 = vperm.xlu0 %1691, %v1674
    %v1693 = vpop.permute.xlu0 %1692
    %1696 = vset.pattern.permute.xlu0 32
    %1697 = vperm.xlu0 %1696, %v1675
    %v1698 = vpop.permute.xlu0 %1697
    %1701 = vset.pattern.permute.xlu0 32
    %1702 = vperm.xlu0 %1701, %v1676
    %v1703 = vpop.permute.xlu0 %1702
    %1706 = vset.pattern.permute.xlu0 32
    %1707 = vperm.xlu0 %1706, %v1677
    %v1708 = vpop.permute.xlu0 %1707
    %1711 = vset.pattern.permute.xlu0 32
    %1712 = vperm.xlu0 %1711, %v1678
    %v1713 = vpop.permute.xlu0 %1712
    %1716 = vset.pattern.permute.xlu0 32
    %1717 = vperm.xlu0 %1716, %v1679
    %v1718 = vpop.permute.xlu0 %1717
    %v1720 = vmul.f32 %v1683, %v1147
    %v1721 = vmul.f32 %v1688, %v1148
    %v1722 = vmul.f32 %v1693, %v1149
    %v1723 = vmul.f32 %v1698, %v1150
    %v1724 = vmul.f32 %v1703, %v1151
    %v1725 = vmul.f32 %v1708, %v1152
    %v1726 = vmul.f32 %v1713, %v1153
    %v1727 = vmul.f32 %v1718, %v1154
    %v1728 = vsel %vm463, %v1720, 0.0
    %v1729 = vrot.slane %v1728, 4
    %v1730 = vadd.f32 %v1728, %v1729
    %v1731 = vrot.slane %v1730, 2
    %v1732 = vadd.f32 %v1730, %v1731
    %v1733 = vrot.slane %v1732, 1
    %v1734 = vadd.f32 %v1732, %v1733
    %v1735 = vsel %vm463, %v1721, 0.0
    %v1736 = vrot.slane %v1735, 4
    %v1737 = vadd.f32 %v1735, %v1736
    %v1738 = vrot.slane %v1737, 2
    %v1739 = vadd.f32 %v1737, %v1738
    %v1740 = vrot.slane %v1739, 1
    %v1741 = vadd.f32 %v1739, %v1740
    %v1742 = vsel %vm463, %v1722, 0.0
    %v1743 = vrot.slane %v1742, 4
    %v1744 = vadd.f32 %v1742, %v1743
    %v1745 = vrot.slane %v1744, 2
    %v1746 = vadd.f32 %v1744, %v1745
    %v1747 = vrot.slane %v1746, 1
    %v1748 = vadd.f32 %v1746, %v1747
    %v1749 = vsel %vm463, %v1723, 0.0
    %v1750 = vrot.slane %v1749, 4
    %v1751 = vadd.f32 %v1749, %v1750
    %v1752 = vrot.slane %v1751, 2
    %v1753 = vadd.f32 %v1751, %v1752
    %v1754 = vrot.slane %v1753, 1
    %v1755 = vadd.f32 %v1753, %v1754
    %v1756 = vsel %vm463, %v1724, 0.0
    %v1757 = vrot.slane %v1756, 4
    %v1758 = vadd.f32 %v1756, %v1757
    %v1759 = vrot.slane %v1758, 2
    %v1760 = vadd.f32 %v1758, %v1759
    %v1761 = vrot.slane %v1760, 1
    %v1762 = vadd.f32 %v1760, %v1761
    %v1763 = vsel %vm463, %v1725, 0.0
    %v1764 = vrot.slane %v1763, 4
    %v1765 = vadd.f32 %v1763, %v1764
    %v1766 = vrot.slane %v1765, 2
    %v1767 = vadd.f32 %v1765, %v1766
    %v1768 = vrot.slane %v1767, 1
    %v1769 = vadd.f32 %v1767, %v1768
    %v1770 = vsel %vm463, %v1726, 0.0
    %v1771 = vrot.slane %v1770, 4
    %v1772 = vadd.f32 %v1770, %v1771
    %v1773 = vrot.slane %v1772, 2
    %v1774 = vadd.f32 %v1772, %v1773
    %v1775 = vrot.slane %v1774, 1
    %v1776 = vadd.f32 %v1774, %v1775
    %v1777 = vsel %vm463, %v1727, 0.0
    %v1778 = vrot.slane %v1777, 4
    %v1779 = vadd.f32 %v1777, %v1778
    %v1780 = vrot.slane %v1779, 2
    %v1781 = vadd.f32 %v1779, %v1780
    %v1782 = vrot.slane %v1781, 1
    %v1783 = vadd.f32 %v1781, %v1782
    %vm1792 = vcmask 1041409
    %v1793 = vsel %vm1792, %v1741, %v1734
    %vm1794 = vcmask 1042434
    %v1795 = vsel %vm1794, %v1748, %v1793
    %vm1796 = vcmask 1043459
    %v1797 = vsel %vm1796, %v1755, %v1795
    %vm1798 = vcmask 1044484
    %v1799 = vsel %vm1798, %v1762, %v1797
    %vm1800 = vcmask 1045509
    %v1801 = vsel %vm1800, %v1769, %v1799
    %vm1802 = vcmask 1046534
    %v1803 = vsel %vm1802, %v1776, %v1801
    %vm1804 = vcmask 1047559
    %v1805 = vsel %vm1804, %v1783, %v1803
    %1806 = vrot.lane.b32.xlu0 %v1805, 32
    %v1807 = vpop.permute.xlu0 %1806
    %v1808 = vld [vmem:[%s4 + $0x60] sm:$0xff]
    %v1809 = vld [vmem:[%s4 + $0x68] sm:$0xff]
    %v1810 = vld [vmem:[%s4 + $0x70] sm:$0xff]
    %v1811 = vld [vmem:[%s4 + $0x78] sm:$0xff]
    %v1812 = vperm.slane %v28, 0
    %1813 = vrot.lane.b32.xlu0 %v1807, 96
    %v1814 = vpop.permute.xlu0 %1813
    %v1815 = vsel %vm463, %v1814, 0
    %1817 = vmatpush.msra.mxu0 0.0
    %1818 = vmatpush.msra.mxu0 0.0
    %1819 = vmatpush.msra.mxu0 0.0
    %1820 = vmatpush.msra.mxu0 0.0
    %1821 = vmatpush.msra.mxu0 0.0
    %1822 = vmatpush.msra.mxu0 0.0
    %1823 = vmatpush.msra.mxu0 0.0
    %1824 = vmatpush.msra.mxu0 0.0
    %1825 = vmatpush.msra.mxu0 0.0
    %1826 = vmatpush.msra.mxu0 0.0
    %1827 = vmatpush.msra.mxu0 0.0
    %1828 = vmatpush.msra.mxu0 0.0
    %1829 = vmatpush.msra.mxu0 %v1811
    %1830 = vmatpush.msra.mxu0 %v1810
    %1831 = vmatpush.msra.mxu0 %v1809
    %1832 = vmatpush.msra.mxu0 %v1808
    %1833 = vmatmul.f32.gmra.mxu0 %v1232
    %v1834 = vpop.f32.mrf.mxu0
    %v1835 = vadd.f32 %v1812, %v1834
    %1836 = vmatmul.f32.gmra.mxu0 %v1815
    %v1837 = vpop.f32.mrf.mxu0
    %v1838 = vadd.f32 %v1812, %v1837
    %1839 = vdwg.mxu0
    %v1840 = vtanh.pop %v1835
    %v1841 = vxor.u32 %v1835, 2147483648
    %v1842 = vmul.f32 %v1841, 1.442695
    %v1843 = vpow.pop %v1842
    %v1844 = vadd.f32 %v1843, 1.0
    %v1845 = vrcp.pop %v1844
    %v1846 = vmul.f32 %v1844, %v1845
    %v1847 = vsub.f32 1.0, %v1846
    %v1848 = vmul.f32 %v1845, %v1847
    %v1849 = vadd.f32 %v1845, %v1848
    %vm1850 = vweird.f32 %v1844
    %vm1851 = vweird.f32 %v1845
    %vm1852 = vmor %vm1850, %vm1851
    %v1853 = vsel %vm1852, %v1845, %v1849
    %v1854 = vand.u32 2147483647, %v1844
    %vm1855 = vcmp.eq.f32.partialorder %v1854, 8.507059e+37
    %v1856 = vand.u32 %v1844, 2147483648
    %v1857 = vor.u32 1.1754944e-38, %v1856
    %v1858 = vsel %vm1855, %v1857, %v1853
    %v1859 = vmul.f32 1.0, %v1858
    %1861 = vrot.lane.b32.xlu0 %v1859, 96
    %v1862 = vpop.permute.xlu0 %1861
    %v1864 = vmul.f32 %v1840, %v1862
    %v1865 = vtanh.pop %v1838
    %v1866 = vxor.u32 %v1838, 2147483648
    %v1867 = vmul.f32 %v1866, 1.442695
    %v1868 = vpow.pop %v1867
    %v1869 = vadd.f32 %v1868, 1.0
    %v1870 = vrcp.pop %v1869
    %v1871 = vmul.f32 %v1869, %v1870
    %v1872 = vsub.f32 1.0, %v1871
    %v1873 = vmul.f32 %v1870, %v1872
    %v1874 = vadd.f32 %v1870, %v1873
    %vm1875 = vweird.f32 %v1869
    %vm1876 = vweird.f32 %v1870
    %vm1877 = vmor %vm1875, %vm1876
    %v1878 = vsel %vm1877, %v1870, %v1874
    %v1879 = vand.u32 2147483647, %v1869
    %vm1880 = vcmp.eq.f32.partialorder %v1879, 8.507059e+37
    %v1881 = vand.u32 %v1869, 2147483648
    %v1882 = vor.u32 1.1754944e-38, %v1881
    %v1883 = vsel %vm1880, %v1882, %v1878
    %v1884 = vmul.f32 1.0, %v1883
    %1886 = vrot.lane.b32.xlu0 %v1884, 96
    %v1887 = vpop.permute.xlu0 %1886
    %v1889 = vmul.f32 %v1865, %v1887
    %v1890 = vld [vmem:[%s4 + $0x80] sm:$0xff]
    %v1891 = vld [vmem:[%s4 + $0x88] sm:$0xff]
    %v1892 = vld [vmem:[%s4 + $0x90] sm:$0xff]
    %v1893 = vld [vmem:[%s4 + $0x98] sm:$0xff]
    %1895 = vrot.lane.b32.xlu0 %v1889, 64
    %v1896 = vpop.permute.xlu0 %1895
    %v1898 = vmul.f32 %v1864, %v1896
    %v1899 = vperm.slane %v29, 0
    %v1901 = vsel %vm463, %v1898, 0
    %1903 = vmatpush.msra.mxu0 0.0
    %1904 = vmatpush.msra.mxu0 0.0
    %1905 = vmatpush.msra.mxu0 0.0
    %1906 = vmatpush.msra.mxu0 0.0
    %1907 = vmatpush.msra.mxu0 0.0
    %1908 = vmatpush.msra.mxu0 0.0
    %1909 = vmatpush.msra.mxu0 0.0
    %1910 = vmatpush.msra.mxu0 0.0
    %1911 = vmatpush.msra.mxu0 0.0
    %1912 = vmatpush.msra.mxu0 0.0
    %1913 = vmatpush.msra.mxu0 0.0
    %1914 = vmatpush.msra.mxu0 0.0
    %1915 = vmatpush.msra.mxu0 %v1893
    %1916 = vmatpush.msra.mxu0 %v1892
    %1917 = vmatpush.msra.mxu0 %v1891
    %1918 = vmatpush.msra.mxu0 %v1890
    %1919 = vmatmul.f32.gmra.mxu0 %v1901
    %v1920 = vpop.f32.mrf.mxu0
    %v1921 = vadd.f32 %v1899, %v1920
    %1922 = vdwg.mxu0
    %v1923 = vtanh.pop %v1921
    %v1924 = vxor.u32 %v1921, 2147483648
    %v1925 = vmul.f32 %v1924, 1.442695
    %v1926 = vpow.pop %v1925
    %v1927 = vadd.f32 %v1926, 1.0
    %v1928 = vrcp.pop %v1927
    %v1929 = vmul.f32 %v1927, %v1928
    %v1930 = vsub.f32 1.0, %v1929
    %v1931 = vmul.f32 %v1928, %v1930
    %v1932 = vadd.f32 %v1928, %v1931
    %vm1933 = vweird.f32 %v1927
    %vm1934 = vweird.f32 %v1928
    %vm1935 = vmor %vm1933, %vm1934
    %v1936 = vsel %vm1935, %v1928, %v1932
    %v1937 = vand.u32 2147483647, %v1927
    %vm1938 = vcmp.eq.f32.partialorder %v1937, 8.507059e+37
    %v1939 = vand.u32 %v1927, 2147483648
    %v1940 = vor.u32 1.1754944e-38, %v1939
    %v1941 = vsel %vm1938, %v1940, %v1936
    %v1942 = vmul.f32 1.0, %v1941
    %1944 = vrot.lane.b32.xlu0 %v1942, 96
    %v1945 = vpop.permute.xlu0 %1944
    %v1947 = vmul.f32 %v1923, %v1945
    %v1948 = vld [vmem:[%s4 + $0xa0] sm:$0xff]
    %v1949 = vld [vmem:[%s4 + $0xa8] sm:$0xff]
    %v1950 = vld [vmem:[%s4 + $0xb0] sm:$0xff]
    %v1951 = vld [vmem:[%s4 + $0xb8] sm:$0xff]
    %v1952 = vperm.slane %v30, 0
    %v1954 = vsel %vm463, %v1947, 0
    %1956 = vmatpush.msra.mxu0 0.0
    %1957 = vmatpush.msra.mxu0 0.0
    %1958 = vmatpush.msra.mxu0 0.0
    %1959 = vmatpush.msra.mxu0 0.0
    %1960 = vmatpush.msra.mxu0 0.0
    %1961 = vmatpush.msra.mxu0 0.0
    %1962 = vmatpush.msra.mxu0 0.0
    %1963 = vmatpush.msra.mxu0 0.0
    %1964 = vmatpush.msra.mxu0 0.0
    %1965 = vmatpush.msra.mxu0 0.0
    %1966 = vmatpush.msra.mxu0 0.0
    %1967 = vmatpush.msra.mxu0 0.0
    %1968 = vmatpush.msra.mxu0 %v1951
    %1969 = vmatpush.msra.mxu0 %v1950
    %1970 = vmatpush.msra.mxu0 %v1949
    %1971 = vmatpush.msra.mxu0 %v1948
    %1972 = vmatmul.f32.gmra.mxu0 %v1954
    %v1973 = vpop.f32.mrf.mxu0
    %v1974 = vadd.f32 %v1952, %v1973
    %1975 = vdwg.mxu0
    %vm1976 = vcmask 123904
    %1977 = vst.msk [vmem:[#allocation2] sm:$0x3] %vm1976, %v1974
    // Predicated region
    $region26: #{model_forward.1} parent=1 // pred_check
      _
    $region27: #{model_forward.1} parent=1 // pred_check_branch
      %1979 = sbr.rel (0) target = $region29
    $region28: #{model_forward.1} parent=1 // pred_region
      %1981 = vsyncadd [#allocation3], 0
      %s1983 = sshll.u32 [#allocation2], 4
      %s1984 = int_to_ptr.vmem [resolvable:$true] %s1983
      %s1985 = sshll.u32 %s6, 4
      %s1986 = int_to_ptr.hbm [resolvable:$true] %s1985
      %1988 = dma.vmem_to_hbm [thread:$0]  %s1984, 32, %s1986, [#allocation3]
    $region29: #{model_forward.1} parent=1 // pred_fallthru
      _
    // Predicated region
    $region30: #{model_forward.1} parent=1 // pred_check
      _
    $region31: #{model_forward.1} parent=1 // pred_check_branch
      %1990 = sbr.rel (0) target = $region33
    $region32: #{model_forward.1} parent=1 // pred_region
      %1992 = dma.done [#allocation3], 32
    $region33: #{model_forward.1} parent=1 // pred_fallthru
      _
    %1993 = vsyncpa [#allocation3], 1

</llo_original>
